<compile_context>
chip_gen: v6e
topology: v6e:2x2x1
jax: 0.10.0
libtpu: 0.0.40
codegen_flags: <defaults>
</compile_context>

<pallas_src>
import functools

import jax
import jax.numpy as jnp
from jax import lax
from jax.experimental import pallas as pl
from jax.experimental.pallas import tpu as pltpu

LANE = 128


def _round_up(x, m):
    return (x + m - 1) // m * m


def _bottleneck_kernel(stride, Ho, Wo,
                       x_ref, w1_ref, b1_ref, wd_ref, bd_ref, w2_ref, b2_ref,
                       o_ref):
    _, H, W, C_in = x_ref.shape
    C_mid = w1_ref.shape[1]          # lane-padded expansion width
    C_out = w2_ref.shape[1]          # true output channels (unpadded in HBM)

    # ---- stage 1: 1x1 expansion (bf16 MXU matmul, f32 accum) + shift + ReLU6
    x = x_ref[0].reshape(H * W, C_in)                        # true C_in, no pad
    h = jnp.dot(x, w1_ref[...], preferred_element_type=jnp.float32)
    h = jnp.clip(h + b1_ref[...], 0.0, 6.0)                  # folded-BN shift
    h = h.reshape(H, W, C_mid)

    # ---- stage 2: 3x3 depthwise conv, pad=1 (+ shift + ReLU6) -------------
    # W-axis (sublane) neighbours via XLU rolls + boundary masks; built once.
    col = lax.broadcasted_iota(jnp.int32, (1, W, 1), 1)
    h_m1 = jnp.where(col == 0, 0.0, pltpu.roll(h, 1, axis=1))          # h[:, x-1]
    h_p1 = jnp.where(col == W - 1, 0.0, pltpu.roll(h, W - 1, axis=1))  # h[:, x+1]
    taps = (h_m1, h, h_p1)

    wd = wd_ref[...]                                         # (9, C_mid), BN scale folded
    zrow = jnp.zeros((1, W, C_mid), jnp.float32)
    # bias-seeded accumulator (full-resolution stride-1 depthwise output)
    acc = jnp.broadcast_to(bd_ref[...].reshape(1, 1, C_mid), (H, W, C_mid))
    for dy in range(3):
        rc = (taps[0] * wd[3 * dy + 0:3 * dy + 1]
              + taps[1] * wd[3 * dy + 1:3 * dy + 2]
              + taps[2] * wd[3 * dy + 2:3 * dy + 3])
        if dy == 0:      # out[y] += rc[y - 1] : shift rows down, zero top row
            rc = jnp.concatenate([zrow, rc[:H - 1]], axis=0)
        elif dy == 2:    # out[y] += rc[y + 1] : shift rows up, zero bottom row
            rc = jnp.concatenate([rc[1:], zrow], axis=0)
        acc = acc + rc
    g = jnp.clip(acc, 0.0, 6.0)
    if stride != 1:
        # single strided subsample (row axis is leading-dim cheap; one sublane
        # strided slice along W).  TODO(synk): parity-split for stride=2.
        g = g[::stride, ::stride, :]

    # ---- stage 3: 1x1 projection (bf16 MXU matmul, f32 accum), linear BN ---
    gb = g.reshape(Ho * Wo, C_mid).astype(jnp.bfloat16)
    out = jnp.dot(gb, w2_ref[...], preferred_element_type=jnp.float32)
    out = out + b2_ref[...]
    o_ref[...] = out.reshape(1, Ho, Wo, C_out)               # true C_out store


def fold_params(params):
    """Fold BN scales into conv weights, pad only the internal C_mid to 128,
    cast matmul weights to bf16.  Do this once per network, not per call."""
    C_in, C_mid = params["w1"].shape
    C_out = params["w2"].shape[1]
    Cm_p = _round_up(C_mid, LANE)
    pad_m = Cm_p - C_mid

    w1 = jnp.pad(params["w1"] * params["s1"], ((0, 0), (0, pad_m))).astype(jnp.bfloat16)
    wd = jnp.pad(params["wd"].reshape(9, C_mid) * params["sd"],
                 ((0, 0), (0, pad_m))).astype(jnp.float32)
    w2 = jnp.pad(params["w2"] * params["s2"], ((0, pad_m), (0, 0))).astype(jnp.bfloat16)
    b1 = jnp.pad(params["b1"], ((0, 0), (0, pad_m))).astype(jnp.float32)
    bd = jnp.pad(params["bd"], ((0, 0), (0, pad_m))).astype(jnp.float32)
    b2 = params["b2"].astype(jnp.float32)
    return dict(w1=w1, b1=b1, wd=wd, bd=bd, w2=w2, b2=b2)


def linear_bottleneck_nhwc(x_nhwc, fp, *, stride=1):
    """NHWC-native forward.  x_nhwc: (N, H, W, C_in) f32 or bf16."""
    N, H, W, C_in = x_nhwc.shape
    C_out = fp["w2"].shape[1]
    Ho = (H - 1) // stride + 1
    Wo = (W - 1) // stride + 1

    kernel = functools.partial(_bottleneck_kernel, stride, Ho, Wo)
    cmap = lambda n: (0, 0)                                  # resident params

    return pl.pallas_call(
        kernel,
        out_shape=jax.ShapeDtypeStruct((N, Ho, Wo, C_out), jnp.float32),
        grid_spec=pltpu.PrefetchScalarGridSpec(
            num_scalar_prefetch=0,
            grid=(N,),                                       # one image / step
            in_specs=[
                pl.BlockSpec((1, H, W, C_in), lambda n: (n, 0, 0, 0)),
                pl.BlockSpec(fp["w1"].shape, cmap),          # (C_in, Cm_p) bf16
                pl.BlockSpec(fp["b1"].shape, cmap),          # (1, Cm_p)
                pl.BlockSpec(fp["wd"].shape, cmap),          # (9, Cm_p)
                pl.BlockSpec(fp["bd"].shape, cmap),          # (1, Cm_p)
                pl.BlockSpec(fp["w2"].shape, cmap),          # (Cm_p, C_out) bf16
                pl.BlockSpec(fp["b2"].shape, cmap),          # (1, C_out)
            ],
            out_specs=pl.BlockSpec((1, Ho, Wo, C_out), lambda n: (n, 0, 0, 0)),
        ),
        compiler_params=pltpu.CompilerParams(
            dimension_semantics=("parallel",),
            vmem_limit_bytes=40 * 1024 * 1024),
    )(x_nhwc.astype(jnp.bfloat16),
      fp["w1"], fp["b1"], fp["wd"], fp["bd"], fp["w2"], fp["b2"])


def linear_bottleneck(x_nchw, params, *, stride=1):
    """NCHW wrapper matching the PyTorch module interface."""
    fp = fold_params(params)
    x = jnp.transpose(x_nchw, (0, 2, 3, 1))                  # NCHW -> NHWC (model entry)
    out = linear_bottleneck_nhwc(x, fp, stride=stride)
    return jnp.transpose(out, (0, 3, 1, 2))                  # NHWC -> NCHW (model exit)


def init_params(key, c_in, c_out, expansion):
    """Deterministic synthetic parameters (conv weights + BN affine)."""
    c_mid = expansion * c_in
    ks = jax.random.split(key, 15)

    def bn_fold(k0, k1, k2, k3, c):
        gamma = 1.0 + 0.1 * jax.random.normal(k0, (c,), jnp.float32)
        beta = 0.1 * jax.random.normal(k1, (c,), jnp.float32)
        mean = 0.1 * jax.random.normal(k2, (c,), jnp.float32)
        var = jnp.abs(jax.random.normal(k3, (c,), jnp.float32)) + 0.5
        scale = gamma / jnp.sqrt(var + 1e-5)
        shift = beta - mean * scale
        return scale.reshape(1, c), shift.reshape(1, c)

    w1 = 0.1 * jax.random.normal(ks[0], (c_in, c_mid), jnp.float32)
    s1, b1 = bn_fold(ks[1], ks[2], ks[3], ks[4], c_mid)
    wd = 0.1 * jax.random.normal(ks[5], (3, 3, c_mid), jnp.float32)
    sd, bd = bn_fold(ks[6], ks[7], ks[8], ks[9], c_mid)
    w2 = 0.1 * jax.random.normal(ks[10], (c_mid, c_out), jnp.float32)
    s2, b2 = bn_fold(ks[11], ks[12], ks[13], ks[14], c_out)
    return dict(w1=w1, s1=s1, b1=b1, wd=wd, sd=sd, bd=bd,
                w2=w2, s2=s2, b2=b2)


def ref_forward(x_nchw, params, *, stride=1):
    """Pure-JAX f32 reference (XLA convs) for correctness checking."""
    c_mid = params["w1"].shape[1]
    x = jnp.transpose(x_nchw, (0, 2, 3, 1))                  # NHWC
    h = jnp.einsum("nhwc,cd->nhwd", x, params["w1"])
    h = jnp.clip(h * params["s1"] + params["b1"], 0.0, 6.0)
    wd = params["wd"].reshape(3, 3, 1, c_mid)                # HWIO, depthwise
    g = lax.conv_general_dilated(
        h, wd, (stride, stride), ((1, 1), (1, 1)),
        dimension_numbers=("NHWC", "HWIO", "NHWC"),
        feature_group_count=c_mid)
    g = jnp.clip(g * params["sd"] + params["bd"], 0.0, 6.0)
    o = jnp.einsum("nhwc,cd->nhwd", g, params["w2"])
    o = o * params["s2"] + params["b2"]
    return jnp.transpose(o, (0, 3, 1, 2))


if __name__ == "__main__":
    key = jax.random.PRNGKey(0)
    kx, kp = jax.random.split(key)

    # small shapes consistent with the module's forward
    N, C_in, H, W = 2, 4, 16, 16
    C_out, expansion, stride = 8, 6, 1

    x = jax.random.normal(kx, (N, C_in, H, W), jnp.float32)
    params = init_params(kp, C_in, C_out, expansion)

    out = linear_bottleneck(x, params, stride=stride)
    out = jax.block_until_ready(out)

    ref = ref_forward(x, params, stride=stride)
    assert out.shape == ref.shape == (N, C_out, H // stride, W // stride)
    # tolerance accounts for the two bf16 MXU matmuls (f32 accumulation)
    if not jnp.allclose(out, ref, rtol=3e-2, atol=3e-2):
        raise AssertionError("Pallas kernel mismatch vs JAX reference")

    print("KERNEL_OK")
</pallas_src>

<mosaic_0001>
module attributes {stable_mosaic.version = 11 : i64} {
  func.func @_bottleneck_kernel(%arg0: i32, %arg1: memref<1x16x16x4xbf16, #tpu.memory_space<vmem>>, %arg2: memref<4x128xbf16, #tpu.memory_space<vmem>>, %arg3: memref<1x128xf32, #tpu.memory_space<vmem>>, %arg4: memref<9x128xf32, #tpu.memory_space<vmem>>, %arg5: memref<1x128xf32, #tpu.memory_space<vmem>>, %arg6: memref<128x8xbf16, #tpu.memory_space<vmem>>, %arg7: memref<1x8xf32, #tpu.memory_space<vmem>>, %arg8: memref<1x16x16x8xf32, #tpu.memory_space<vmem>>) attributes {dimension_semantics = [#tpu.dimension_semantics<parallel>], iteration_bounds = array<i64: 2>, scalar_prefetch = 0 : i64, scratch_operands = 0 : i64, tpu.core_type = #tpu.core_type<tc>, window_params = [{transform_indices = @transform_0, window_bounds = array<i64: 1, 16, 16, 4>}, {pipeline_mode = #tpu.pipeline_mode<synchronous>, transform_indices = @transform_1, window_bounds = array<i64: 4, 128>}, {pipeline_mode = #tpu.pipeline_mode<synchronous>, transform_indices = @transform_2, window_bounds = array<i64: 1, 128>}, {pipeline_mode = #tpu.pipeline_mode<synchronous>, transform_indices = @transform_3, window_bounds = array<i64: 9, 128>}, {pipeline_mode = #tpu.pipeline_mode<synchronous>, transform_indices = @transform_4, window_bounds = array<i64: 1, 128>}, {pipeline_mode = #tpu.pipeline_mode<synchronous>, transform_indices = @transform_5, window_bounds = array<i64: 128, 8>}, {pipeline_mode = #tpu.pipeline_mode<synchronous>, transform_indices = @transform_6, window_bounds = array<i64: 1, 8>}, {transform_indices = @transform_7, window_bounds = array<i64: 1, 16, 16, 8>}]} {
    %c0 = arith.constant 0 : index
    %c0_0 = arith.constant 0 : index
    %c0_1 = arith.constant 0 : index
    %c0_2 = arith.constant 0 : index
    %0 = vector.load %arg1[%c0, %c0_0, %c0_1, %c0_2] : memref<1x16x16x4xbf16, #tpu.memory_space<vmem>>, vector<1x16x16x4xbf16>
    %1 = vector.shape_cast %0 : vector<1x16x16x4xbf16> to vector<16x16x4xbf16>
    %2 = vector.shape_cast %1 : vector<16x16x4xbf16> to vector<256x4xbf16>
    %c0_3 = arith.constant 0 : index
    %c0_4 = arith.constant 0 : index
    %3 = vector.load %arg2[%c0_3, %c0_4] : memref<4x128xbf16, #tpu.memory_space<vmem>>, vector<4x128xbf16>
    %cst = arith.constant dense<0.000000e+00> : vector<256x128xf32>
    %4 = tpu.matmul %2, %3, %cst {dimension_numbers = #tpu.dot_dimension_numbers<[1], [0], [0], [1], [0, 0, 1, 1], [], []>} : vector<256x4xbf16>, vector<4x128xbf16>, vector<256x128xf32> -> vector<256x128xf32>
    %c0_5 = arith.constant 0 : index
    %c0_6 = arith.constant 0 : index
    %5 = vector.load %arg3[%c0_5, %c0_6] : memref<1x128xf32, #tpu.memory_space<vmem>>, vector<1x128xf32>
    %6 = vector.broadcast %5 : vector<1x128xf32> to vector<256x128xf32>
    %7 = arith.addf %4, %6 : vector<256x128xf32>
    %cst_7 = arith.constant 0.000000e+00 : f32
    %cst_8 = arith.constant 6.000000e+00 : f32
    %8 = vector.broadcast %cst_7 : f32 to vector<256x128xf32>
    %9 = arith.maximumf %8, %7 : vector<256x128xf32>
    %10 = vector.broadcast %cst_8 : f32 to vector<256x128xf32>
    %11 = arith.minimumf %10, %9 : vector<256x128xf32>
    %12 = vector.shape_cast %11 : vector<256x128xf32> to vector<16x16x128xf32>
    %13 = tpu.iota {dimensions = array<i32: 1>} : vector<1x16x1xi32>
    %c0_i32 = arith.constant 0 : i32
    %14 = vector.broadcast %c0_i32 : i32 to vector<1x16x1xi32>
    %15 = arith.cmpi eq, %13, %14 : vector<1x16x1xi32>
    %c1_i32 = arith.constant 1 : i32
    %16 = tpu.dynamic_rotate %12 by %c1_i32 dim 1 : vector<16x16x128xf32>, i32 -> vector<16x16x128xf32>
    %cst_9 = arith.constant 0.000000e+00 : f32
    %17 = vector.shape_cast %15 : vector<1x16x1xi1> to vector<1x16x1xi1>
    %18 = vector.broadcast %17 : vector<1x16x1xi1> to vector<16x16x128xi1>
    %19 = vector.broadcast %cst_9 : f32 to vector<16x16x128xf32>
    %20 = arith.select %18, %19, %16 : vector<16x16x128xi1>, vector<16x16x128xf32>
    %c15_i32 = arith.constant 15 : i32
    %21 = vector.broadcast %c15_i32 : i32 to vector<1x16x1xi32>
    %22 = arith.cmpi eq, %13, %21 : vector<1x16x1xi32>
    %c15_i32_10 = arith.constant 15 : i32
    %23 = tpu.dynamic_rotate %12 by %c15_i32_10 dim 1 : vector<16x16x128xf32>, i32 -> vector<16x16x128xf32>
    %cst_11 = arith.constant 0.000000e+00 : f32
    %24 = vector.shape_cast %22 : vector<1x16x1xi1> to vector<1x16x1xi1>
    %25 = vector.broadcast %24 : vector<1x16x1xi1> to vector<16x16x128xi1>
    %26 = vector.broadcast %cst_11 : f32 to vector<16x16x128xf32>
    %27 = arith.select %25, %26, %23 : vector<16x16x128xi1>, vector<16x16x128xf32>
    %c0_12 = arith.constant 0 : index
    %c0_13 = arith.constant 0 : index
    %28 = vector.load %arg4[%c0_12, %c0_13] : memref<9x128xf32, #tpu.memory_space<vmem>>, vector<9x128xf32>
    %cst_14 = arith.constant 0.000000e+00 : f32
    %29 = vector.broadcast %cst_14 : f32 to vector<1x16x128xf32>
    %c0_15 = arith.constant 0 : index
    %c0_16 = arith.constant 0 : index
    %30 = vector.load %arg5[%c0_15, %c0_16] : memref<1x128xf32, #tpu.memory_space<vmem>>, vector<1x128xf32>
    %31 = vector.shape_cast %30 : vector<1x128xf32> to vector<1x1x128xf32>
    %32 = vector.shape_cast %31 : vector<1x1x128xf32> to vector<1x1x128xf32>
    %33 = vector.broadcast %32 : vector<1x1x128xf32> to vector<16x16x128xf32>
    %34 = vector.extract_strided_slice %28 {offsets = [0, 0], sizes = [1, 128], strides = [1, 1]} : vector<9x128xf32> to vector<1x128xf32>
    %35 = vector.shape_cast %34 : vector<1x128xf32> to vector<1x1x128xf32>
    %36 = vector.broadcast %35 : vector<1x1x128xf32> to vector<16x16x128xf32>
    %37 = arith.mulf %20, %36 : vector<16x16x128xf32>
    %38 = vector.extract_strided_slice %28 {offsets = [1, 0], sizes = [1, 128], strides = [1, 1]} : vector<9x128xf32> to vector<1x128xf32>
    %39 = vector.shape_cast %38 : vector<1x128xf32> to vector<1x1x128xf32>
    %40 = vector.broadcast %39 : vector<1x1x128xf32> to vector<16x16x128xf32>
    %41 = arith.mulf %12, %40 : vector<16x16x128xf32>
    %42 = arith.addf %37, %41 : vector<16x16x128xf32>
    %43 = vector.extract_strided_slice %28 {offsets = [2, 0], sizes = [1, 128], strides = [1, 1]} : vector<9x128xf32> to vector<1x128xf32>
    %44 = vector.shape_cast %43 : vector<1x128xf32> to vector<1x1x128xf32>
    %45 = vector.broadcast %44 : vector<1x1x128xf32> to vector<16x16x128xf32>
    %46 = arith.mulf %27, %45 : vector<16x16x128xf32>
    %47 = arith.addf %42, %46 : vector<16x16x128xf32>
    %48 = vector.extract_strided_slice %47 {offsets = [0, 0, 0], sizes = [15, 16, 128], strides = [1, 1, 1]} : vector<16x16x128xf32> to vector<15x16x128xf32>
    %49 = tpu.concatenate %29, %48 in 0 : vector<1x16x128xf32>, vector<15x16x128xf32> -> vector<16x16x128xf32>
    %50 = arith.addf %33, %49 : vector<16x16x128xf32>
    %51 = vector.extract_strided_slice %28 {offsets = [3, 0], sizes = [1, 128], strides = [1, 1]} : vector<9x128xf32> to vector<1x128xf32>
    %52 = vector.shape_cast %51 : vector<1x128xf32> to vector<1x1x128xf32>
    %53 = vector.broadcast %52 : vector<1x1x128xf32> to vector<16x16x128xf32>
    %54 = arith.mulf %20, %53 : vector<16x16x128xf32>
    %55 = vector.extract_strided_slice %28 {offsets = [4, 0], sizes = [1, 128], strides = [1, 1]} : vector<9x128xf32> to vector<1x128xf32>
    %56 = vector.shape_cast %55 : vector<1x128xf32> to vector<1x1x128xf32>
    %57 = vector.broadcast %56 : vector<1x1x128xf32> to vector<16x16x128xf32>
    %58 = arith.mulf %12, %57 : vector<16x16x128xf32>
    %59 = arith.addf %54, %58 : vector<16x16x128xf32>
    %60 = vector.extract_strided_slice %28 {offsets = [5, 0], sizes = [1, 128], strides = [1, 1]} : vector<9x128xf32> to vector<1x128xf32>
    %61 = vector.shape_cast %60 : vector<1x128xf32> to vector<1x1x128xf32>
    %62 = vector.broadcast %61 : vector<1x1x128xf32> to vector<16x16x128xf32>
    %63 = arith.mulf %27, %62 : vector<16x16x128xf32>
    %64 = arith.addf %59, %63 : vector<16x16x128xf32>
    %65 = arith.addf %50, %64 : vector<16x16x128xf32>
    %66 = vector.extract_strided_slice %28 {offsets = [6, 0], sizes = [1, 128], strides = [1, 1]} : vector<9x128xf32> to vector<1x128xf32>
    %67 = vector.shape_cast %66 : vector<1x128xf32> to vector<1x1x128xf32>
    %68 = vector.broadcast %67 : vector<1x1x128xf32> to vector<16x16x128xf32>
    %69 = arith.mulf %20, %68 : vector<16x16x128xf32>
    %70 = vector.extract_strided_slice %28 {offsets = [7, 0], sizes = [1, 128], strides = [1, 1]} : vector<9x128xf32> to vector<1x128xf32>
    %71 = vector.shape_cast %70 : vector<1x128xf32> to vector<1x1x128xf32>
    %72 = vector.broadcast %71 : vector<1x1x128xf32> to vector<16x16x128xf32>
    %73 = arith.mulf %12, %72 : vector<16x16x128xf32>
    %74 = arith.addf %69, %73 : vector<16x16x128xf32>
    %75 = vector.extract_strided_slice %28 {offsets = [8, 0], sizes = [1, 128], strides = [1, 1]} : vector<9x128xf32> to vector<1x128xf32>
    %76 = vector.shape_cast %75 : vector<1x128xf32> to vector<1x1x128xf32>
    %77 = vector.broadcast %76 : vector<1x1x128xf32> to vector<16x16x128xf32>
    %78 = arith.mulf %27, %77 : vector<16x16x128xf32>
    %79 = arith.addf %74, %78 : vector<16x16x128xf32>
    %80 = vector.extract_strided_slice %79 {offsets = [1, 0, 0], sizes = [15, 16, 128], strides = [1, 1, 1]} : vector<16x16x128xf32> to vector<15x16x128xf32>
    %81 = tpu.concatenate %80, %29 in 0 : vector<15x16x128xf32>, vector<1x16x128xf32> -> vector<16x16x128xf32>
    %82 = arith.addf %65, %81 : vector<16x16x128xf32>
    %cst_17 = arith.constant 0.000000e+00 : f32
    %cst_18 = arith.constant 6.000000e+00 : f32
    %83 = vector.broadcast %cst_17 : f32 to vector<16x16x128xf32>
    %84 = arith.maximumf %83, %82 : vector<16x16x128xf32>
    %85 = vector.broadcast %cst_18 : f32 to vector<16x16x128xf32>
    %86 = arith.minimumf %85, %84 : vector<16x16x128xf32>
    %87 = vector.shape_cast %86 : vector<16x16x128xf32> to vector<256x128xf32>
    %88 = arith.truncf %87 : vector<256x128xf32> to vector<256x128xbf16>
    %c0_19 = arith.constant 0 : index
    %c0_20 = arith.constant 0 : index
    %89 = vector.load %arg6[%c0_19, %c0_20] : memref<128x8xbf16, #tpu.memory_space<vmem>>, vector<128x8xbf16>
    %cst_21 = arith.constant dense<0.000000e+00> : vector<256x8xf32>
    %90 = tpu.matmul %88, %89, %cst_21 {dimension_numbers = #tpu.dot_dimension_numbers<[1], [0], [0], [1], [0, 0, 1, 1], [], []>} : vector<256x128xbf16>, vector<128x8xbf16>, vector<256x8xf32> -> vector<256x8xf32>
    %c0_22 = arith.constant 0 : index
    %c0_23 = arith.constant 0 : index
    %91 = vector.load %arg7[%c0_22, %c0_23] : memref<1x8xf32, #tpu.memory_space<vmem>>, vector<1x8xf32>
    %92 = vector.broadcast %91 : vector<1x8xf32> to vector<256x8xf32>
    %93 = arith.addf %90, %92 : vector<256x8xf32>
    %94 = vector.shape_cast %93 : vector<256x8xf32> to vector<1x16x16x8xf32>
    %c0_24 = arith.constant 0 : index
    %c0_25 = arith.constant 0 : index
    %c0_26 = arith.constant 0 : index
    %c0_27 = arith.constant 0 : index
    %95 = vector.load %arg8[%c0_24, %c0_25, %c0_26, %c0_27] : memref<1x16x16x8xf32, #tpu.memory_space<vmem>>, vector<1x16x16x8xf32>
    tpu.vector_store %arg8[%c0_24, %c0_25, %c0_26, %c0_27], %94 {strides = array<i32>} : memref<1x16x16x8xf32, #tpu.memory_space<vmem>>, vector<1x16x16x8xf32>,
    return
  }
  func.func @transform_0(%arg0: i32) -> (i32, i32, i32, i32) {
    %c0_i32 = arith.constant 0 : i32
    %c0_i32_0 = arith.constant 0 : i32
    %c0_i32_1 = arith.constant 0 : i32
    %c0_i32_2 = arith.constant 0 : i32
    return %arg0, %c0_i32, %c0_i32_0, %c0_i32_1 : i32, i32, i32, i32
  }
  func.func @transform_1(%arg0: i32) -> (i32, i32) {
    %c0_i32 = arith.constant 0 : i32
    %c0_i32_0 = arith.constant 0 : i32
    %c0_i32_1 = arith.constant 0 : i32
    return %c0_i32, %c0_i32_0 : i32, i32
  }
  func.func @transform_2(%arg0: i32) -> (i32, i32) {
    %c0_i32 = arith.constant 0 : i32
    %c0_i32_0 = arith.constant 0 : i32
    %c0_i32_1 = arith.constant 0 : i32
    return %c0_i32, %c0_i32_0 : i32, i32
  }
  func.func @transform_3(%arg0: i32) -> (i32, i32) {
    %c0_i32 = arith.constant 0 : i32
    %c0_i32_0 = arith.constant 0 : i32
    %c0_i32_1 = arith.constant 0 : i32
    return %c0_i32, %c0_i32_0 : i32, i32
  }
  func.func @transform_4(%arg0: i32) -> (i32, i32) {
    %c0_i32 = arith.constant 0 : i32
    %c0_i32_0 = arith.constant 0 : i32
    %c0_i32_1 = arith.constant 0 : i32
    return %c0_i32, %c0_i32_0 : i32, i32
  }
  func.func @transform_5(%arg0: i32) -> (i32, i32) {
    %c0_i32 = arith.constant 0 : i32
    %c0_i32_0 = arith.constant 0 : i32
    %c0_i32_1 = arith.constant 0 : i32
    return %c0_i32, %c0_i32_0 : i32, i32
  }
  func.func @transform_6(%arg0: i32) -> (i32, i32) {
    %c0_i32 = arith.constant 0 : i32
    %c0_i32_0 = arith.constant 0 : i32
    %c0_i32_1 = arith.constant 0 : i32
    return %c0_i32, %c0_i32_0 : i32, i32
  }
  func.func @transform_7(%arg0: i32) -> (i32, i32, i32, i32) {
    %c0_i32 = arith.constant 0 : i32
    %c0_i32_0 = arith.constant 0 : i32
    %c0_i32_1 = arith.constant 0 : i32
    %c0_i32_2 = arith.constant 0 : i32
    return %arg0, %c0_i32, %c0_i32_0, %c0_i32_1 : i32, i32, i32, i32
  }
}

</mosaic_0001>

<llo_original>
// kernel: tpu_custom_call.1
$region0: #{tpu_custom_call.1}
  #allocation0 [shape = 'u32[]', space=smem, size = 0x4, offset = 0x4, fixed_abs, tag = 'smem constant byte address 0x4 - core index']
  #allocation1 [shape = 'u32[144,128]{1,0:T(1,128)}', space=vmem, size = 0x12000, scoped, tag = 'internal scratch']
  %s0 = inlined_call_operand.vmem [shape: bf16[2,16,16,4], index: 0, kind: input, shape index: {}]
  %s1 = inlined_call_operand.vmem [shape: bf16[4,128], index: 1, kind: input, shape index: {}]
  %s2 = inlined_call_operand.vmem [shape: f32[1,128], index: 2, kind: input, shape index: {}]
  %s3 = inlined_call_operand.vmem [shape: f32[9,128], index: 3, kind: input, shape index: {}]
  %s4 = inlined_call_operand.vmem [shape: f32[1,128], index: 4, kind: input, shape index: {}]
  %s5 = inlined_call_operand.vmem [shape: bf16[128,8], index: 5, kind: input, shape index: {}]
  %s6 = inlined_call_operand.vmem [shape: f32[1,8], index: 6, kind: input, shape index: {}]
  %s7 = inlined_call_operand.vmem [shape: f32[2,16,16,8], index: 7, kind: output, shape index: {}]
  %s8 = sld [smem:[#allocation0]]
  $region61: #{tpu_custom_call.1} parent=0
    _
  %s10 = ssub.s32 1, %s8
  %s11 = scalar_select 0, %s10, %s8
  loop: start=0, step=1, limit=4
  $region2: #{tpu_custom_call.1} parent=0 // loop_pre_header
    _
  $region3: #{tpu_custom_call.1} parent=0 // loop_header
    %s13 = sphi 0, %s17
    %p14 = scmp.ge.s32.totalorder %s13, 4
    %s23 = sphi 0, %s25
    %s26 = sphi 0, %s23
    %s27 = sphi 0, %s26
    %s43 = sphi 0, %s27
    %s47 = sphi 0, %s47
    %s49 = sphi 0, %s47
    %s50 = sphi 0, %s49
    %s64 = sphi 0, %s50
    %s68 = sphi 0, %s68
    %s70 = sphi 0, %s68
    %s71 = sphi 0, %s70
    %s85 = sphi 0, %s71
    %s89 = sphi 0, %s89
    %s91 = sphi 0, %s89
    %s92 = sphi 0, %s91
    %s106 = sphi 0, %s92
    %s110 = sphi 0, %s110
    %s112 = sphi 0, %s110
    %s113 = sphi 0, %s112
    %s127 = sphi 0, %s113
    %s131 = sphi 0, %s131
    %s133 = sphi 0, %s131
    %s134 = sphi 0, %s133
    %s148 = sphi 0, %s134
    %s152 = sphi 0, %s152
    %s154 = sphi 0, %s152
    %s155 = sphi 0, %s154
    %s169 = sphi 0, %s155
    %s175 = sphi 0, %s177
    %s178 = sphi 0, %s175
    %s179 = sphi 0, %s178
    %s195 = sphi 0, %s179
  $region4: #{tpu_custom_call.1} parent=0 // loop_header_branch
    %16 = sbr.rel (%p14) target = $region8
  $region5: #{tpu_custom_call.1} parent=0 // loop_body
    %s18 = ssub.s32 %s13, 1
    %s19 = ssub.s32 %s13, 2
    %s20 = sadd.s32 %s13, 1
    %s21 = ssub.s32 %s13, %s20
    %p22 = scmp.eq.s32.totalorder %s21, 0
    %s24 = sadd.s32 %s23, 1
    %s25 = scalar_select %p22, %s23, %s24
    %p28 = pneg %p22
    %p29 = scmp.eq.s32.totalorder %s13, 1
    %p30 = por %p28, %p29
    %p31 = scmp.ne.s32.totalorder %s23, %s26
    %p32 = scmp.eq.s32.totalorder %s13, 0
    %p33 = por %p31, %p32
    %p34 = scmp.ne.s32.totalorder %s23, %s26
    %p35 = scmp.eq.s32.totalorder %s18, 1
    %p36 = por %p34, %p35
    %p37 = scmp.ne.s32.totalorder %s26, %s27
    %p38 = scmp.eq.s32.totalorder %s18, 0
    %p39 = por %p37, %p38
    %p40 = scmp.ne.s32.totalorder %s26, %s27
    %p41 = scmp.eq.s32.totalorder %s19, 1
    %p42 = por %p40, %p41
    %p44 = scmp.ne.s32.totalorder %s27, %s43
    %p45 = scmp.eq.s32.totalorder %s19, 0
    %p46 = por %p44, %p45
    %s48 = sadd.s32 %s47, 1
    %p51 = scmp.eq.s32.totalorder %s13, 1
    %p52 = scmp.ne.s32.totalorder %s47, %s49
    %p53 = scmp.eq.s32.totalorder %s13, 0
    %p54 = por %p52, %p53
    %p55 = scmp.ne.s32.totalorder %s47, %s49
    %p56 = scmp.eq.s32.totalorder %s18, 1
    %p57 = por %p55, %p56
    %p58 = scmp.ne.s32.totalorder %s49, %s50
    %p59 = scmp.eq.s32.totalorder %s18, 0
    %p60 = por %p58, %p59
    %p61 = scmp.ne.s32.totalorder %s49, %s50
    %p62 = scmp.eq.s32.totalorder %s19, 1
    %p63 = por %p61, %p62
    %p65 = scmp.ne.s32.totalorder %s50, %s64
    %p66 = scmp.eq.s32.totalorder %s19, 0
    %p67 = por %p65, %p66
    %s69 = sadd.s32 %s68, 1
    %p72 = scmp.eq.s32.totalorder %s13, 1
    %p73 = scmp.ne.s32.totalorder %s68, %s70
    %p74 = scmp.eq.s32.totalorder %s13, 0
    %p75 = por %p73, %p74
    %p76 = scmp.ne.s32.totalorder %s68, %s70
    %p77 = scmp.eq.s32.totalorder %s18, 1
    %p78 = por %p76, %p77
    %p79 = scmp.ne.s32.totalorder %s70, %s71
    %p80 = scmp.eq.s32.totalorder %s18, 0
    %p81 = por %p79, %p80
    %p82 = scmp.ne.s32.totalorder %s70, %s71
    %p83 = scmp.eq.s32.totalorder %s19, 1
    %p84 = por %p82, %p83
    %p86 = scmp.ne.s32.totalorder %s71, %s85
    %p87 = scmp.eq.s32.totalorder %s19, 0
    %p88 = por %p86, %p87
    %s90 = sadd.s32 %s89, 1
    %p93 = scmp.eq.s32.totalorder %s13, 1
    %p94 = scmp.ne.s32.totalorder %s89, %s91
    %p95 = scmp.eq.s32.totalorder %s13, 0
    %p96 = por %p94, %p95
    %p97 = scmp.ne.s32.totalorder %s89, %s91
    %p98 = scmp.eq.s32.totalorder %s18, 1
    %p99 = por %p97, %p98
    %p100 = scmp.ne.s32.totalorder %s91, %s92
    %p101 = scmp.eq.s32.totalorder %s18, 0
    %p102 = por %p100, %p101
    %p103 = scmp.ne.s32.totalorder %s91, %s92
    %p104 = scmp.eq.s32.totalorder %s19, 1
    %p105 = por %p103, %p104
    %p107 = scmp.ne.s32.totalorder %s92, %s106
    %p108 = scmp.eq.s32.totalorder %s19, 0
    %p109 = por %p107, %p108
    %s111 = sadd.s32 %s110, 1
    %p114 = scmp.eq.s32.totalorder %s13, 1
    %p115 = scmp.ne.s32.totalorder %s110, %s112
    %p116 = scmp.eq.s32.totalorder %s13, 0
    %p117 = por %p115, %p116
    %p118 = scmp.ne.s32.totalorder %s110, %s112
    %p119 = scmp.eq.s32.totalorder %s18, 1
    %p120 = por %p118, %p119
    %p121 = scmp.ne.s32.totalorder %s112, %s113
    %p122 = scmp.eq.s32.totalorder %s18, 0
    %p123 = por %p121, %p122
    %p124 = scmp.ne.s32.totalorder %s112, %s113
    %p125 = scmp.eq.s32.totalorder %s19, 1
    %p126 = por %p124, %p125
    %p128 = scmp.ne.s32.totalorder %s113, %s127
    %p129 = scmp.eq.s32.totalorder %s19, 0
    %p130 = por %p128, %p129
    %s132 = sadd.s32 %s131, 1
    %p135 = scmp.eq.s32.totalorder %s13, 1
    %p136 = scmp.ne.s32.totalorder %s131, %s133
    %p137 = scmp.eq.s32.totalorder %s13, 0
    %p138 = por %p136, %p137
    %p139 = scmp.ne.s32.totalorder %s131, %s133
    %p140 = scmp.eq.s32.totalorder %s18, 1
    %p141 = por %p139, %p140
    %p142 = scmp.ne.s32.totalorder %s133, %s134
    %p143 = scmp.eq.s32.totalorder %s18, 0
    %p144 = por %p142, %p143
    %p145 = scmp.ne.s32.totalorder %s133, %s134
    %p146 = scmp.eq.s32.totalorder %s19, 1
    %p147 = por %p145, %p146
    %p149 = scmp.ne.s32.totalorder %s134, %s148
    %p150 = scmp.eq.s32.totalorder %s19, 0
    %p151 = por %p149, %p150
    %s153 = sadd.s32 %s152, 1
    %p156 = scmp.eq.s32.totalorder %s13, 1
    %p157 = scmp.ne.s32.totalorder %s152, %s154
    %p158 = scmp.eq.s32.totalorder %s13, 0
    %p159 = por %p157, %p158
    %p160 = scmp.ne.s32.totalorder %s152, %s154
    %p161 = scmp.eq.s32.totalorder %s18, 1
    %p162 = por %p160, %p161
    %p163 = scmp.ne.s32.totalorder %s154, %s155
    %p164 = scmp.eq.s32.totalorder %s18, 0
    %p165 = por %p163, %p164
    %p166 = scmp.ne.s32.totalorder %s154, %s155
    %p167 = scmp.eq.s32.totalorder %s19, 1
    %p168 = por %p166, %p167
    %p170 = scmp.ne.s32.totalorder %s155, %s169
    %p171 = scmp.eq.s32.totalorder %s19, 0
    %p172 = por %p170, %p171
    %s173 = ssub.s32 %s13, %s20
    %p174 = scmp.eq.s32.totalorder %s173, 0
    %s176 = sadd.s32 %s175, 1
    %s177 = scalar_select %p174, %s175, %s176
    %p180 = pneg %p174
    %p181 = scmp.eq.s32.totalorder %s13, 1
    %p182 = por %p180, %p181
    %p183 = scmp.ne.s32.totalorder %s175, %s178
    %p184 = scmp.eq.s32.totalorder %s13, 0
    %p185 = por %p183, %p184
    %p186 = scmp.ne.s32.totalorder %s175, %s178
    %p187 = scmp.eq.s32.totalorder %s18, 1
    %p188 = por %p186, %p187
    %p189 = scmp.ne.s32.totalorder %s178, %s179
    %p190 = scmp.eq.s32.totalorder %s18, 0
    %p191 = por %p189, %p190
    %p192 = scmp.ne.s32.totalorder %s178, %s179
    %p193 = scmp.eq.s32.totalorder %s19, 1
    %p194 = por %p192, %p193
    %p196 = scmp.ne.s32.totalorder %s179, %s195
    %p197 = scmp.eq.s32.totalorder %s19, 0
    %p198 = por %p196, %p197
    %p199 = scmp.le.s32.totalorder 1, %s13
    %p200 = scmp.lt.s32.totalorder %s13, 3
    %p201 = pnand %p199, %p200
    %p202 = pneg %p201
    // Predicated region
    $region9: #{tpu_custom_call.1} parent=5 // pred_check
      _
    $region10: #{tpu_custom_call.1} parent=5 // pred_check_branch
      %204 = sbr.rel (%p201) target = $region12
    $region11: #{tpu_custom_call.1} parent=5 // pred_region
      %s205 = ssub.s32 %s13, 1
      // Predicated region
      $region13: #{tpu_custom_call.1} parent=11 // pred_check
        %p206 = pneg %p60
      $region14: #{tpu_custom_call.1} parent=11 // pred_check_branch
        %208 = sbr.rel (%p206) target = $region16
      $region15: #{tpu_custom_call.1} parent=11 // pred_region
        _
      $region16: #{tpu_custom_call.1} parent=11 // pred_fallthru
        _
      // Predicated region
      $region17: #{tpu_custom_call.1} parent=11 // pred_check
        %p209 = pneg %p81
      $region18: #{tpu_custom_call.1} parent=11 // pred_check_branch
        %211 = sbr.rel (%p209) target = $region20
      $region19: #{tpu_custom_call.1} parent=11 // pred_region
        _
      $region20: #{tpu_custom_call.1} parent=11 // pred_fallthru
        _
      // Predicated region
      $region21: #{tpu_custom_call.1} parent=11 // pred_check
        %p212 = pneg %p102
      $region22: #{tpu_custom_call.1} parent=11 // pred_check_branch
        %214 = sbr.rel (%p212) target = $region24
      $region23: #{tpu_custom_call.1} parent=11 // pred_region
        _
      $region24: #{tpu_custom_call.1} parent=11 // pred_fallthru
        _
      // Predicated region
      $region25: #{tpu_custom_call.1} parent=11 // pred_check
        %p215 = pneg %p123
      $region26: #{tpu_custom_call.1} parent=11 // pred_check_branch
        %217 = sbr.rel (%p215) target = $region28
      $region27: #{tpu_custom_call.1} parent=11 // pred_region
        _
      $region28: #{tpu_custom_call.1} parent=11 // pred_fallthru
        _
      // Predicated region
      $region29: #{tpu_custom_call.1} parent=11 // pred_check
        %p218 = pneg %p144
      $region30: #{tpu_custom_call.1} parent=11 // pred_check_branch
        %220 = sbr.rel (%p218) target = $region32
      $region31: #{tpu_custom_call.1} parent=11 // pred_region
        _
      $region32: #{tpu_custom_call.1} parent=11 // pred_fallthru
        _
      // Predicated region
      $region33: #{tpu_custom_call.1} parent=11 // pred_check
        %p221 = pneg %p165
      $region34: #{tpu_custom_call.1} parent=11 // pred_check_branch
        %223 = sbr.rel (%p221) target = $region36
      $region35: #{tpu_custom_call.1} parent=11 // pred_region
        _
      $region36: #{tpu_custom_call.1} parent=11 // pred_fallthru
        _
    $region12: #{tpu_custom_call.1} parent=5 // pred_fallthru
      _
    %p224 = scmp.lt.s32.totalorder %s13, 2
    // Predicated region
    $region37: #{tpu_custom_call.1} parent=5 // pred_check
      %p225 = pneg %p224
    $region38: #{tpu_custom_call.1} parent=5 // pred_check_branch
      %227 = sbr.rel (%p225) target = $region40
    $region39: #{tpu_custom_call.1} parent=5 // pred_region
      // Predicated region
      $region41: #{tpu_custom_call.1} parent=39 // pred_check
        %p228 = pneg %p33
      $region42: #{tpu_custom_call.1} parent=39 // pred_check_branch
        %230 = sbr.rel (%p228) target = $region44
      $region43: #{tpu_custom_call.1} parent=39 // pred_region
        %p231 = scmp.lt.s32.totalorder %s13, 1
        %s232 = scalar_select %p231, %s13, 1
        %s233 = smul.addr %s232, 32
        %s234 = smul.addr %s233, 4
        %s235 = scalar_lea.vmem %s0, %s234
      $region44: #{tpu_custom_call.1} parent=39 // pred_fallthru
        _
    $region40: #{tpu_custom_call.1} parent=5 // pred_fallthru
      _
    %p236 = scmp.le.s32.totalorder 1, %s13
    %p237 = scmp.lt.s32.totalorder %s13, 3
    %p238 = pnand %p236, %p237
    %p239 = pneg %p238
    // Predicated region
    $region45: #{tpu_custom_call.1} parent=5 // pred_check
      _
    $region46: #{tpu_custom_call.1} parent=5 // pred_check_branch
      %241 = sbr.rel (%p238) target = $region48
    $region47: #{tpu_custom_call.1} parent=5 // pred_region
      %s242 = ssub.s32 %s13, 1
      %p243 = scmp.lt.s32.totalorder %s18, 1
      %s244 = scalar_select %p243, %s18, 1
      %s245 = smul.addr %s244, 32
      %s246 = smul.addr %s245, 4
      %s247 = scalar_lea.vmem %s0, %s246
      %p248 = pneg %p39
      %p249 = pneg %p36
      %p250 = pneg %p60
      %p251 = pneg %p57
      %p252 = pneg %p81
      %p253 = pneg %p78
      %p254 = pneg %p102
      %p255 = pneg %p99
      %p256 = pneg %p123
      %p257 = pneg %p120
      %p258 = pneg %p144
      %p259 = pneg %p141
      %p260 = pneg %p165
      %p261 = pneg %p162
      %p262 = pneg %p191
      %p263 = pneg %p188
      %p264 = scmp.lt.s32.totalorder %s18, 1
      %s265 = scalar_select %p264, %s18, 1
      %s266 = smul.addr %s265, 32
      %s267 = smul.addr %s266, 8
      %s268 = scalar_lea.vmem %s7, %s267
      %p269 = scmp.lt.s32.totalorder %s18, 1
      %s270 = scalar_select %p269, %s18, 1
      %s271 = smul.addr %s270, 32
      %s272 = smul.addr %s271, 4
      %s273 = scalar_lea.vmem %s0, %s272
      %p274 = scmp.lt.s32.totalorder %s18, 1
      %s275 = scalar_select %p274, %s18, 1
      %s276 = smul.addr %s275, 32
      %s277 = smul.addr %s276, 8
      %s278 = scalar_lea.vmem %s7, %s277
      %v280 = vld [vmem:[%s273] sm:$0xf]
      %v281 = vld [vmem:[%s273 + $0x4] sm:$0xf]
      %v282 = vld [vmem:[%s273 + $0x8] sm:$0xf]
      %v283 = vld [vmem:[%s273 + $0xc] sm:$0xf]
      %v284 = vld [vmem:[%s273 + $0x10] sm:$0xf]
      %v285 = vld [vmem:[%s273 + $0x14] sm:$0xf]
      %v286 = vld [vmem:[%s273 + $0x18] sm:$0xf]
      %v287 = vld [vmem:[%s273 + $0x1c] sm:$0xf]
      %v288 = vld [vmem:[%s273 + $0x20] sm:$0xf]
      %v289 = vld [vmem:[%s273 + $0x24] sm:$0xf]
      %v290 = vld [vmem:[%s273 + $0x28] sm:$0xf]
      %v291 = vld [vmem:[%s273 + $0x2c] sm:$0xf]
      %v292 = vld [vmem:[%s273 + $0x30] sm:$0xf]
      %v293 = vld [vmem:[%s273 + $0x34] sm:$0xf]
      %v294 = vld [vmem:[%s273 + $0x38] sm:$0xf]
      %v295 = vld [vmem:[%s273 + $0x3c] sm:$0xf]
      %v296 = vld [vmem:[%s273 + $0x40] sm:$0xf]
      %v297 = vld [vmem:[%s273 + $0x44] sm:$0xf]
      %v298 = vld [vmem:[%s273 + $0x48] sm:$0xf]
      %v299 = vld [vmem:[%s273 + $0x4c] sm:$0xf]
      %v300 = vld [vmem:[%s273 + $0x50] sm:$0xf]
      %v301 = vld [vmem:[%s273 + $0x54] sm:$0xf]
      %v302 = vld [vmem:[%s273 + $0x58] sm:$0xf]
      %v303 = vld [vmem:[%s273 + $0x5c] sm:$0xf]
      %v304 = vld [vmem:[%s273 + $0x60] sm:$0xf]
      %v305 = vld [vmem:[%s273 + $0x64] sm:$0xf]
      %v306 = vld [vmem:[%s273 + $0x68] sm:$0xf]
      %v307 = vld [vmem:[%s273 + $0x6c] sm:$0xf]
      %v308 = vld [vmem:[%s273 + $0x70] sm:$0xf]
      %v309 = vld [vmem:[%s273 + $0x74] sm:$0xf]
      %v310 = vld [vmem:[%s273 + $0x78] sm:$0xf]
      %v311 = vld [vmem:[%s273 + $0x7c] sm:$0xf]
      %v312 = vld [vmem:[%s1] sm:$0x3]
      %v313 = vld [vmem:[%s2] sm:$0x1]
      %v315 = vlaneseq
      %v316 = vshrl.u32 %v315, 7
      %v317 = vsub.s32 0, %v316
      %v318 = vrot.slane %v313, %v317
      %v352 = vunpack.c.l.b16 %v280
      %v353 = vunpack.c.l.b16 %v281
      %v354 = vunpack.c.l.b16 %v282
      %v355 = vunpack.c.l.b16 %v283
      %v356 = vunpack.c.l.b16 %v284
      %v357 = vunpack.c.l.b16 %v285
      %v358 = vunpack.c.l.b16 %v286
      %v359 = vunpack.c.l.b16 %v287
      %v360 = vunpack.c.l.b16 %v288
      %v361 = vunpack.c.l.b16 %v289
      %v362 = vunpack.c.l.b16 %v290
      %v363 = vunpack.c.l.b16 %v291
      %v364 = vunpack.c.l.b16 %v292
      %v365 = vunpack.c.l.b16 %v293
      %v366 = vunpack.c.l.b16 %v294
      %v367 = vunpack.c.l.b16 %v295
      %v368 = vunpack.c.l.b16 %v296
      %v369 = vunpack.c.l.b16 %v297
      %v370 = vunpack.c.l.b16 %v298
      %v371 = vunpack.c.l.b16 %v299
      %v372 = vunpack.c.l.b16 %v300
      %v373 = vunpack.c.l.b16 %v301
      %v374 = vunpack.c.l.b16 %v302
      %v375 = vunpack.c.l.b16 %v303
      %v376 = vunpack.c.l.b16 %v304
      %v377 = vunpack.c.l.b16 %v305
      %v378 = vunpack.c.l.b16 %v306
      %v379 = vunpack.c.l.b16 %v307
      %v380 = vunpack.c.l.b16 %v308
      %v381 = vunpack.c.l.b16 %v309
      %v382 = vunpack.c.l.b16 %v310
      %v383 = vunpack.c.l.b16 %v311
      %v384 = vpack.c.b16 %v353, %v352
      %v385 = vpack.c.b16 %v355, %v354
      %v386 = vpack.c.b16 %v357, %v356
      %v387 = vpack.c.b16 %v359, %v358
      %v388 = vpack.c.b16 %v361, %v360
      %v389 = vpack.c.b16 %v363, %v362
      %v390 = vpack.c.b16 %v365, %v364
      %v391 = vpack.c.b16 %v367, %v366
      %v392 = vpack.c.b16 %v369, %v368
      %v393 = vpack.c.b16 %v371, %v370
      %v394 = vpack.c.b16 %v373, %v372
      %v395 = vpack.c.b16 %v375, %v374
      %v396 = vpack.c.b16 %v377, %v376
      %v397 = vpack.c.b16 %v379, %v378
      %v398 = vpack.c.b16 %v381, %v380
      %v399 = vpack.c.b16 %v383, %v382
      %vm400 = vcmask 31744
      %v402 = vsel %vm400, %v384, 0
      %v405 = vsel %vm400, %v385, 0
      %v408 = vsel %vm400, %v386, 0
      %v411 = vsel %vm400, %v387, 0
      %v414 = vsel %vm400, %v388, 0
      %v417 = vsel %vm400, %v389, 0
      %v420 = vsel %vm400, %v390, 0
      %v423 = vsel %vm400, %v391, 0
      %v426 = vsel %vm400, %v392, 0
      %v429 = vsel %vm400, %v393, 0
      %v432 = vsel %vm400, %v394, 0
      %v435 = vsel %vm400, %v395, 0
      %v438 = vsel %vm400, %v396, 0
      %v441 = vsel %vm400, %v397, 0
      %v444 = vsel %vm400, %v398, 0
      %v447 = vsel %vm400, %v399, 0
      %vm449 = vcmask 1041408
      %v451 = vsel %vm449, %v312, 0
      %453 = vmatprep.subr.bf16.mxu0 0
      %454 = vmatpush1.bf16.msra.mxu0 0
      %455 = vmatprep.subr.bf16.mxu0 0
      %456 = vmatpush1.bf16.msra.mxu0 0
      %457 = vmatprep.subr.bf16.mxu0 0
      %458 = vmatpush1.bf16.msra.mxu0 0
      %459 = vmatprep.subr.bf16.mxu0 0
      %460 = vmatpush1.bf16.msra.mxu0 0
      %461 = vmatprep.subr.bf16.mxu0 0
      %462 = vmatpush1.bf16.msra.mxu0 0
      %463 = vmatprep.subr.bf16.mxu0 0
      %464 = vmatpush1.bf16.msra.mxu0 0
      %465 = vmatprep.subr.bf16.mxu0 0
      %466 = vmatpush1.bf16.msra.mxu0 0
      %467 = vmatprep.subr.bf16.mxu0 0
      %468 = vmatpush1.bf16.msra.mxu0 %v451
      %469 = vmatprep.subr.bf16.mxu0 0
      %470 = vmatpush2.bf16.msra.mxu0 0
      %471 = vmatprep.subr.bf16.mxu0 0
      %472 = vmatpush2.bf16.msra.mxu0 0
      %473 = vmatprep.subr.bf16.mxu0 0
      %474 = vmatpush2.bf16.msra.mxu0 0
      %475 = vmatprep.subr.bf16.mxu0 0
      %476 = vmatpush2.bf16.msra.mxu0 0
      %477 = vmatprep.subr.bf16.mxu0 0
      %478 = vmatpush2.bf16.msra.mxu0 0
      %479 = vmatprep.subr.bf16.mxu0 0
      %480 = vmatpush2.bf16.msra.mxu0 0
      %481 = vmatprep.subr.bf16.mxu0 0
      %482 = vmatpush2.bf16.msra.mxu0 0
      %483 = vmatprep.subr.bf16.mxu0 0
      %484 = vmatpush2.bf16.msra.mxu0 0
      %485 = vmatprep.mubr.bf16.mxu0 0
      %486 = vmatmul.mubr.bf16.gmra.mxu0 %v402
      %v487 = vpop.f32.mrf.mxu0
      %v488 = vadd.f32 %v318, %v487
      %v489 = vpop.f32.mrf.mxu0
      %v490 = vpop.f32.mrf.mxu0
      %v491 = vadd.f32 %v318, %v490
      %v492 = vpop.f32.mrf.mxu0
      %493 = vmatprep.mubr.bf16.mxu0 0
      %494 = vmatmul.mubr.bf16.gmra.mxu0 %v405
      %v495 = vpop.f32.mrf.mxu0
      %v496 = vadd.f32 %v318, %v495
      %v497 = vpop.f32.mrf.mxu0
      %v498 = vpop.f32.mrf.mxu0
      %v499 = vadd.f32 %v318, %v498
      %v500 = vpop.f32.mrf.mxu0
      %501 = vmatprep.mubr.bf16.mxu0 0
      %502 = vmatmul.mubr.bf16.gmra.mxu0 %v408
      %v503 = vpop.f32.mrf.mxu0
      %v504 = vadd.f32 %v318, %v503
      %v505 = vpop.f32.mrf.mxu0
      %v506 = vpop.f32.mrf.mxu0
      %v507 = vadd.f32 %v318, %v506
      %v508 = vpop.f32.mrf.mxu0
      %509 = vmatprep.mubr.bf16.mxu0 0
      %510 = vmatmul.mubr.bf16.gmra.mxu0 %v411
      %v511 = vpop.f32.mrf.mxu0
      %v512 = vadd.f32 %v318, %v511
      %v513 = vpop.f32.mrf.mxu0
      %v514 = vpop.f32.mrf.mxu0
      %v515 = vadd.f32 %v318, %v514
      %v516 = vpop.f32.mrf.mxu0
      %517 = vmatprep.mubr.bf16.mxu0 0
      %518 = vmatmul.mubr.bf16.gmra.mxu0 %v414
      %v519 = vpop.f32.mrf.mxu0
      %v520 = vadd.f32 %v318, %v519
      %v521 = vpop.f32.mrf.mxu0
      %v522 = vpop.f32.mrf.mxu0
      %v523 = vadd.f32 %v318, %v522
      %v524 = vpop.f32.mrf.mxu0
      %525 = vmatprep.mubr.bf16.mxu0 0
      %526 = vmatmul.mubr.bf16.gmra.mxu0 %v417
      %v527 = vpop.f32.mrf.mxu0
      %v528 = vadd.f32 %v318, %v527
      %v529 = vpop.f32.mrf.mxu0
      %v530 = vpop.f32.mrf.mxu0
      %v531 = vadd.f32 %v318, %v530
      %v532 = vpop.f32.mrf.mxu0
      %533 = vmatprep.mubr.bf16.mxu0 0
      %534 = vmatmul.mubr.bf16.gmra.mxu0 %v420
      %v535 = vpop.f32.mrf.mxu0
      %v536 = vadd.f32 %v318, %v535
      %v537 = vpop.f32.mrf.mxu0
      %v538 = vpop.f32.mrf.mxu0
      %v539 = vadd.f32 %v318, %v538
      %v540 = vpop.f32.mrf.mxu0
      %541 = vmatprep.mubr.bf16.mxu0 0
      %542 = vmatmul.mubr.bf16.gmra.mxu0 %v423
      %v543 = vpop.f32.mrf.mxu0
      %v544 = vadd.f32 %v318, %v543
      %v545 = vpop.f32.mrf.mxu0
      %v546 = vpop.f32.mrf.mxu0
      %v547 = vadd.f32 %v318, %v546
      %v548 = vpop.f32.mrf.mxu0
      %549 = vmatprep.mubr.bf16.mxu0 0
      %550 = vmatmul.mubr.bf16.gmra.mxu0 %v426
      %v551 = vpop.f32.mrf.mxu0
      %v552 = vadd.f32 %v318, %v551
      %v553 = vpop.f32.mrf.mxu0
      %v554 = vpop.f32.mrf.mxu0
      %v555 = vadd.f32 %v318, %v554
      %v556 = vpop.f32.mrf.mxu0
      %557 = vmatprep.mubr.bf16.mxu0 0
      %558 = vmatmul.mubr.bf16.gmra.mxu0 %v429
      %v559 = vpop.f32.mrf.mxu0
      %v560 = vadd.f32 %v318, %v559
      %v561 = vpop.f32.mrf.mxu0
      %v562 = vpop.f32.mrf.mxu0
      %v563 = vadd.f32 %v318, %v562
      %v564 = vpop.f32.mrf.mxu0
      %565 = vmatprep.mubr.bf16.mxu0 0
      %566 = vmatmul.mubr.bf16.gmra.mxu0 %v432
      %v567 = vpop.f32.mrf.mxu0
      %v568 = vadd.f32 %v318, %v567
      %v569 = vpop.f32.mrf.mxu0
      %v570 = vpop.f32.mrf.mxu0
      %v571 = vadd.f32 %v318, %v570
      %v572 = vpop.f32.mrf.mxu0
      %573 = vmatprep.mubr.bf16.mxu0 0
      %574 = vmatmul.mubr.bf16.gmra.mxu0 %v435
      %v575 = vpop.f32.mrf.mxu0
      %v576 = vadd.f32 %v318, %v575
      %v577 = vpop.f32.mrf.mxu0
      %v578 = vpop.f32.mrf.mxu0
      %v579 = vadd.f32 %v318, %v578
      %v580 = vpop.f32.mrf.mxu0
      %581 = vmatprep.mubr.bf16.mxu0 0
      %582 = vmatmul.mubr.bf16.gmra.mxu0 %v438
      %v583 = vpop.f32.mrf.mxu0
      %v584 = vadd.f32 %v318, %v583
      %v585 = vpop.f32.mrf.mxu0
      %v586 = vpop.f32.mrf.mxu0
      %v587 = vadd.f32 %v318, %v586
      %v588 = vpop.f32.mrf.mxu0
      %589 = vmatprep.mubr.bf16.mxu0 0
      %590 = vmatmul.mubr.bf16.gmra.mxu0 %v441
      %v591 = vpop.f32.mrf.mxu0
      %v592 = vadd.f32 %v318, %v591
      %v593 = vpop.f32.mrf.mxu0
      %v594 = vpop.f32.mrf.mxu0
      %v595 = vadd.f32 %v318, %v594
      %v596 = vpop.f32.mrf.mxu0
      %597 = vmatprep.mubr.bf16.mxu0 0
      %598 = vmatmul.mubr.bf16.gmra.mxu0 %v444
      %v599 = vpop.f32.mrf.mxu0
      %v600 = vadd.f32 %v318, %v599
      %v601 = vpop.f32.mrf.mxu0
      %v602 = vpop.f32.mrf.mxu0
      %v603 = vadd.f32 %v318, %v602
      %v604 = vpop.f32.mrf.mxu0
      %605 = vmatprep.mubr.bf16.mxu0 0
      %606 = vmatmul.mubr.bf16.gmra.mxu0 %v447
      %v607 = vpop.f32.mrf.mxu0
      %v608 = vadd.f32 %v318, %v607
      %v609 = vpop.f32.mrf.mxu0
      %v610 = vpop.f32.mrf.mxu0
      %v611 = vadd.f32 %v318, %v610
      %v612 = vpop.f32.mrf.mxu0
      %613 = vdwg.mxu0
      %v614 = vmax.f32 %v488, 0.0
      %v615 = vmax.f32 %v491, 0.0
      %v616 = vmax.f32 %v496, 0.0
      %v617 = vmax.f32 %v499, 0.0
      %v618 = vmax.f32 %v504, 0.0
      %v619 = vmax.f32 %v507, 0.0
      %v620 = vmax.f32 %v512, 0.0
      %v621 = vmax.f32 %v515, 0.0
      %v622 = vmax.f32 %v520, 0.0
      %v623 = vmax.f32 %v523, 0.0
      %v624 = vmax.f32 %v528, 0.0
      %v625 = vmax.f32 %v531, 0.0
      %v626 = vmax.f32 %v536, 0.0
      %v627 = vmax.f32 %v539, 0.0
      %v628 = vmax.f32 %v544, 0.0
      %v629 = vmax.f32 %v547, 0.0
      %v630 = vmax.f32 %v552, 0.0
      %v631 = vmax.f32 %v555, 0.0
      %v632 = vmax.f32 %v560, 0.0
      %v633 = vmax.f32 %v563, 0.0
      %v634 = vmax.f32 %v568, 0.0
      %v635 = vmax.f32 %v571, 0.0
      %v636 = vmax.f32 %v576, 0.0
      %v637 = vmax.f32 %v579, 0.0
      %v638 = vmax.f32 %v584, 0.0
      %v639 = vmax.f32 %v587, 0.0
      %v640 = vmax.f32 %v592, 0.0
      %v641 = vmax.f32 %v595, 0.0
      %v642 = vmax.f32 %v600, 0.0
      %v643 = vmax.f32 %v603, 0.0
      %v644 = vmax.f32 %v608, 0.0
      %v645 = vmax.f32 %v611, 0.0
      %v646 = vmin.f32 %v614, 6.0
      %v647 = vmin.f32 %v615, 6.0
      %v648 = vmin.f32 %v616, 6.0
      %v649 = vmin.f32 %v617, 6.0
      %v650 = vmin.f32 %v618, 6.0
      %v651 = vmin.f32 %v619, 6.0
      %v652 = vmin.f32 %v620, 6.0
      %v653 = vmin.f32 %v621, 6.0
      %v654 = vmin.f32 %v622, 6.0
      %v655 = vmin.f32 %v623, 6.0
      %v656 = vmin.f32 %v624, 6.0
      %v657 = vmin.f32 %v625, 6.0
      %v658 = vmin.f32 %v626, 6.0
      %v659 = vmin.f32 %v627, 6.0
      %v660 = vmin.f32 %v628, 6.0
      %v661 = vmin.f32 %v629, 6.0
      %v662 = vmin.f32 %v630, 6.0
      %v663 = vmin.f32 %v631, 6.0
      %v664 = vmin.f32 %v632, 6.0
      %v665 = vmin.f32 %v633, 6.0
      %v666 = vmin.f32 %v634, 6.0
      %v667 = vmin.f32 %v635, 6.0
      %v668 = vmin.f32 %v636, 6.0
      %v669 = vmin.f32 %v637, 6.0
      %v670 = vmin.f32 %v638, 6.0
      %v671 = vmin.f32 %v639, 6.0
      %v672 = vmin.f32 %v640, 6.0
      %v673 = vmin.f32 %v641, 6.0
      %v674 = vmin.f32 %v642, 6.0
      %v675 = vmin.f32 %v643, 6.0
      %v676 = vmin.f32 %v644, 6.0
      %v677 = vmin.f32 %v645, 6.0
      %v678 = vlaneseq
      %v679 = vshrl.u32 %v678, 7
      %v680 = vadd.s32 %v679, 8
      %vm681 = vcmp.eq.s32.totalorder %v679, 0
      %vm682 = vcmp.eq.s32.totalorder %v680, 0
      %v683 = vrot.slane %v646, 7
      %v684 = vrot.slane %v648, 7
      %v685 = vrot.slane %v650, 7
      %v686 = vrot.slane %v652, 7
      %v687 = vrot.slane %v654, 7
      %v688 = vrot.slane %v656, 7
      %v689 = vrot.slane %v658, 7
      %v690 = vrot.slane %v660, 7
      %v691 = vrot.slane %v662, 7
      %v692 = vrot.slane %v664, 7
      %v693 = vrot.slane %v666, 7
      %v694 = vrot.slane %v668, 7
      %v695 = vrot.slane %v670, 7
      %v696 = vrot.slane %v672, 7
      %v697 = vrot.slane %v674, 7
      %v698 = vrot.slane %v676, 7
      %v699 = vrot.slane %v647, 7
      %v700 = vrot.slane %v649, 7
      %v701 = vrot.slane %v651, 7
      %v702 = vrot.slane %v653, 7
      %v703 = vrot.slane %v655, 7
      %v704 = vrot.slane %v657, 7
      %v705 = vrot.slane %v659, 7
      %v706 = vrot.slane %v661, 7
      %v707 = vrot.slane %v663, 7
      %v708 = vrot.slane %v665, 7
      %v709 = vrot.slane %v667, 7
      %v710 = vrot.slane %v669, 7
      %v711 = vrot.slane %v671, 7
      %v712 = vrot.slane %v673, 7
      %v713 = vrot.slane %v675, 7
      %v714 = vrot.slane %v677, 7
      %vm715 = vcmp.lt.s32.totalorder %v679, 1
      %v716 = vsel %vm715, %v683, %v699
      %v717 = vsel %vm715, %v684, %v700
      %v718 = vsel %vm715, %v685, %v701
      %v719 = vsel %vm715, %v686, %v702
      %v720 = vsel %vm715, %v687, %v703
      %v721 = vsel %vm715, %v688, %v704
      %v722 = vsel %vm715, %v689, %v705
      %v723 = vsel %vm715, %v690, %v706
      %v724 = vsel %vm715, %v691, %v707
      %v725 = vsel %vm715, %v692, %v708
      %v726 = vsel %vm715, %v693, %v709
      %v727 = vsel %vm715, %v694, %v710
      %v728 = vsel %vm715, %v695, %v711
      %v729 = vsel %vm715, %v696, %v712
      %v730 = vsel %vm715, %v697, %v713
      %v731 = vsel %vm715, %v698, %v714
      %v732 = vsel %vm715, %v699, %v683
      %v733 = vsel %vm715, %v700, %v684
      %v734 = vsel %vm715, %v701, %v685
      %v735 = vsel %vm715, %v702, %v686
      %v736 = vsel %vm715, %v703, %v687
      %v737 = vsel %vm715, %v704, %v688
      %v738 = vsel %vm715, %v705, %v689
      %v739 = vsel %vm715, %v706, %v690
      %v740 = vsel %vm715, %v707, %v691
      %v741 = vsel %vm715, %v708, %v692
      %v742 = vsel %vm715, %v709, %v693
      %v743 = vsel %vm715, %v710, %v694
      %v744 = vsel %vm715, %v711, %v695
      %v745 = vsel %vm715, %v712, %v696
      %v746 = vsel %vm715, %v713, %v697
      %v747 = vsel %vm715, %v714, %v698
      %v748 = vsel %vm681, 1, 0
      %v749 = vsel %vm682, 1, 0
      %vm750 = vcmp.eq.s32.totalorder %v748, 1
      %vm751 = vcmp.eq.s32.totalorder %v749, 1
      %v752 = vsel %vm750, 0.0, %v732
      %v753 = vsel %vm751, 0.0, %v716
      %v754 = vsel %vm750, 0.0, %v733
      %v755 = vsel %vm751, 0.0, %v717
      %v756 = vsel %vm750, 0.0, %v734
      %v757 = vsel %vm751, 0.0, %v718
      %v758 = vsel %vm750, 0.0, %v735
      %v759 = vsel %vm751, 0.0, %v719
      %v760 = vsel %vm750, 0.0, %v736
      %v761 = vsel %vm751, 0.0, %v720
      %v762 = vsel %vm750, 0.0, %v737
      %v763 = vsel %vm751, 0.0, %v721
      %v764 = vsel %vm750, 0.0, %v738
      %v765 = vsel %vm751, 0.0, %v722
      %v766 = vsel %vm750, 0.0, %v739
      %v767 = vsel %vm751, 0.0, %v723
      %v768 = vsel %vm750, 0.0, %v740
      %v769 = vsel %vm751, 0.0, %v724
      %v770 = vsel %vm750, 0.0, %v741
      %v771 = vsel %vm751, 0.0, %v725
      %v772 = vsel %vm750, 0.0, %v742
      %v773 = vsel %vm751, 0.0, %v726
      %v774 = vsel %vm750, 0.0, %v743
      %v775 = vsel %vm751, 0.0, %v727
      %v776 = vsel %vm750, 0.0, %v744
      %v777 = vsel %vm751, 0.0, %v728
      %v778 = vsel %vm750, 0.0, %v745
      %v779 = vsel %vm751, 0.0, %v729
      %v780 = vsel %vm750, 0.0, %v746
      %v781 = vsel %vm751, 0.0, %v730
      %v782 = vsel %vm750, 0.0, %v747
      %v783 = vsel %vm751, 0.0, %v731
      %vm784 = vcmp.eq.s32.totalorder %v679, 15
      %vm785 = vcmp.eq.s32.totalorder %v680, 15
      %v786 = vrot.slane %v646, 1
      %v787 = vrot.slane %v648, 1
      %v788 = vrot.slane %v650, 1
      %v789 = vrot.slane %v652, 1
      %v790 = vrot.slane %v654, 1
      %v791 = vrot.slane %v656, 1
      %v792 = vrot.slane %v658, 1
      %v793 = vrot.slane %v660, 1
      %v794 = vrot.slane %v662, 1
      %v795 = vrot.slane %v664, 1
      %v796 = vrot.slane %v666, 1
      %v797 = vrot.slane %v668, 1
      %v798 = vrot.slane %v670, 1
      %v799 = vrot.slane %v672, 1
      %v800 = vrot.slane %v674, 1
      %v801 = vrot.slane %v676, 1
      %v802 = vrot.slane %v647, 1
      %v803 = vrot.slane %v649, 1
      %v804 = vrot.slane %v651, 1
      %v805 = vrot.slane %v653, 1
      %v806 = vrot.slane %v655, 1
      %v807 = vrot.slane %v657, 1
      %v808 = vrot.slane %v659, 1
      %v809 = vrot.slane %v661, 1
      %v810 = vrot.slane %v663, 1
      %v811 = vrot.slane %v665, 1
      %v812 = vrot.slane %v667, 1
      %v813 = vrot.slane %v669, 1
      %v814 = vrot.slane %v671, 1
      %v815 = vrot.slane %v673, 1
      %v816 = vrot.slane %v675, 1
      %v817 = vrot.slane %v677, 1
      %vm818 = vcmp.lt.s32.totalorder %v679, 7
      %v819 = vsel %vm818, %v786, %v802
      %v820 = vsel %vm818, %v787, %v803
      %v821 = vsel %vm818, %v788, %v804
      %v822 = vsel %vm818, %v789, %v805
      %v823 = vsel %vm818, %v790, %v806
      %v824 = vsel %vm818, %v791, %v807
      %v825 = vsel %vm818, %v792, %v808
      %v826 = vsel %vm818, %v793, %v809
      %v827 = vsel %vm818, %v794, %v810
      %v828 = vsel %vm818, %v795, %v811
      %v829 = vsel %vm818, %v796, %v812
      %v830 = vsel %vm818, %v797, %v813
      %v831 = vsel %vm818, %v798, %v814
      %v832 = vsel %vm818, %v799, %v815
      %v833 = vsel %vm818, %v800, %v816
      %v834 = vsel %vm818, %v801, %v817
      %v835 = vsel %vm818, %v802, %v786
      %v836 = vsel %vm818, %v803, %v787
      %v837 = vsel %vm818, %v804, %v788
      %v838 = vsel %vm818, %v805, %v789
      %v839 = vsel %vm818, %v806, %v790
      %v840 = vsel %vm818, %v807, %v791
      %v841 = vsel %vm818, %v808, %v792
      %v842 = vsel %vm818, %v809, %v793
      %v843 = vsel %vm818, %v810, %v794
      %v844 = vsel %vm818, %v811, %v795
      %v845 = vsel %vm818, %v812, %v796
      %v846 = vsel %vm818, %v813, %v797
      %v847 = vsel %vm818, %v814, %v798
      %v848 = vsel %vm818, %v815, %v799
      %v849 = vsel %vm818, %v816, %v800
      %v850 = vsel %vm818, %v817, %v801
      %v851 = vsel %vm784, 1, 0
      %v852 = vsel %vm785, 1, 0
      %vm853 = vcmp.eq.s32.totalorder %v851, 1
      %vm854 = vcmp.eq.s32.totalorder %v852, 1
      %v855 = vsel %vm853, 0.0, %v819
      %v856 = vsel %vm854, 0.0, %v835
      %v857 = vsel %vm853, 0.0, %v820
      %v858 = vsel %vm854, 0.0, %v836
      %v859 = vsel %vm853, 0.0, %v821
      %v860 = vsel %vm854, 0.0, %v837
      %v861 = vsel %vm853, 0.0, %v822
      %v862 = vsel %vm854, 0.0, %v838
      %v863 = vsel %vm853, 0.0, %v823
      %v864 = vsel %vm854, 0.0, %v839
      %v865 = vsel %vm853, 0.0, %v824
      %v866 = vsel %vm854, 0.0, %v840
      %v867 = vsel %vm853, 0.0, %v825
      %v868 = vsel %vm854, 0.0, %v841
      %v869 = vsel %vm853, 0.0, %v826
      %v870 = vsel %vm854, 0.0, %v842
      %v871 = vsel %vm853, 0.0, %v827
      %v872 = vsel %vm854, 0.0, %v843
      %v873 = vsel %vm853, 0.0, %v828
      %v874 = vsel %vm854, 0.0, %v844
      %v875 = vsel %vm853, 0.0, %v829
      %v876 = vsel %vm854, 0.0, %v845
      %v877 = vsel %vm853, 0.0, %v830
      %v878 = vsel %vm854, 0.0, %v846
      %v879 = vsel %vm853, 0.0, %v831
      %v880 = vsel %vm854, 0.0, %v847
      %v881 = vsel %vm853, 0.0, %v832
      %v882 = vsel %vm854, 0.0, %v848
      %v883 = vsel %vm853, 0.0, %v833
      %v884 = vsel %vm854, 0.0, %v849
      %v885 = vsel %vm853, 0.0, %v834
      %v886 = vsel %vm854, 0.0, %v850
      %v887 = vld [vmem:[%s3] sm:$0xff]
      %v888 = vld [vmem:[%s3 + $0x8] sm:$0x1]
      %v889 = vld [vmem:[%s4] sm:$0x1]
      %v891 = vlaneseq
      %v892 = vshrl.u32 %v891, 7
      %v893 = vsub.s32 0, %v892
      %v894 = vrot.slane %v889, %v893
      %v896 = vlaneseq
      %v897 = vshrl.u32 %v896, 7
      %v898 = vsub.s32 0, %v897
      %v899 = vrot.slane %v887, %v898
      %v900 = vmul.f32 %v752, %v899
      %v901 = vmul.f32 %v753, %v899
      %v902 = vmul.f32 %v754, %v899
      %v903 = vmul.f32 %v755, %v899
      %v904 = vmul.f32 %v756, %v899
      %v905 = vmul.f32 %v757, %v899
      %v906 = vmul.f32 %v758, %v899
      %v907 = vmul.f32 %v759, %v899
      %v908 = vmul.f32 %v760, %v899
      %v909 = vmul.f32 %v761, %v899
      %v910 = vmul.f32 %v762, %v899
      %v911 = vmul.f32 %v763, %v899
      %v912 = vmul.f32 %v764, %v899
      %v913 = vmul.f32 %v765, %v899
      %v914 = vmul.f32 %v766, %v899
      %v915 = vmul.f32 %v767, %v899
      %v916 = vmul.f32 %v768, %v899
      %v917 = vmul.f32 %v769, %v899
      %v918 = vmul.f32 %v770, %v899
      %v919 = vmul.f32 %v771, %v899
      %v920 = vmul.f32 %v772, %v899
      %v921 = vmul.f32 %v773, %v899
      %v922 = vmul.f32 %v774, %v899
      %v923 = vmul.f32 %v775, %v899
      %v924 = vmul.f32 %v776, %v899
      %v925 = vmul.f32 %v777, %v899
      %v926 = vmul.f32 %v778, %v899
      %v927 = vmul.f32 %v779, %v899
      %v928 = vmul.f32 %v780, %v899
      %v929 = vmul.f32 %v781, %v899
      %v930 = vlaneseq
      %v931 = vshrl.u32 %v930, 7
      %v932 = vsub.s32 1, %v931
      %v933 = vrot.slane %v887, %v932
      %v934 = vmul.f32 %v646, %v933
      %v935 = vmul.f32 %v647, %v933
      %v936 = vmul.f32 %v648, %v933
      %v937 = vmul.f32 %v649, %v933
      %v938 = vmul.f32 %v650, %v933
      %v939 = vmul.f32 %v651, %v933
      %v940 = vmul.f32 %v652, %v933
      %v941 = vmul.f32 %v653, %v933
      %v942 = vmul.f32 %v654, %v933
      %v943 = vmul.f32 %v655, %v933
      %v944 = vmul.f32 %v656, %v933
      %v945 = vmul.f32 %v657, %v933
      %v946 = vmul.f32 %v658, %v933
      %v947 = vmul.f32 %v659, %v933
      %v948 = vmul.f32 %v660, %v933
      %v949 = vmul.f32 %v661, %v933
      %v950 = vmul.f32 %v662, %v933
      %v951 = vmul.f32 %v663, %v933
      %v952 = vmul.f32 %v664, %v933
      %v953 = vmul.f32 %v665, %v933
      %v954 = vmul.f32 %v666, %v933
      %v955 = vmul.f32 %v667, %v933
      %v956 = vmul.f32 %v668, %v933
      %v957 = vmul.f32 %v669, %v933
      %v958 = vmul.f32 %v670, %v933
      %v959 = vmul.f32 %v671, %v933
      %v960 = vmul.f32 %v672, %v933
      %v961 = vmul.f32 %v673, %v933
      %v962 = vmul.f32 %v674, %v933
      %v963 = vmul.f32 %v675, %v933
      %v964 = vadd.f32 %v900, %v934
      %v965 = vadd.f32 %v901, %v935
      %v966 = vadd.f32 %v902, %v936
      %v967 = vadd.f32 %v903, %v937
      %v968 = vadd.f32 %v904, %v938
      %v969 = vadd.f32 %v905, %v939
      %v970 = vadd.f32 %v906, %v940
      %v971 = vadd.f32 %v907, %v941
      %v972 = vadd.f32 %v908, %v942
      %v973 = vadd.f32 %v909, %v943
      %v974 = vadd.f32 %v910, %v944
      %v975 = vadd.f32 %v911, %v945
      %v976 = vadd.f32 %v912, %v946
      %v977 = vadd.f32 %v913, %v947
      %v978 = vadd.f32 %v914, %v948
      %v979 = vadd.f32 %v915, %v949
      %v980 = vadd.f32 %v916, %v950
      %v981 = vadd.f32 %v917, %v951
      %v982 = vadd.f32 %v918, %v952
      %v983 = vadd.f32 %v919, %v953
      %v984 = vadd.f32 %v920, %v954
      %v985 = vadd.f32 %v921, %v955
      %v986 = vadd.f32 %v922, %v956
      %v987 = vadd.f32 %v923, %v957
      %v988 = vadd.f32 %v924, %v958
      %v989 = vadd.f32 %v925, %v959
      %v990 = vadd.f32 %v926, %v960
      %v991 = vadd.f32 %v927, %v961
      %v992 = vadd.f32 %v928, %v962
      %v993 = vadd.f32 %v929, %v963
      %v994 = vlaneseq
      %v995 = vshrl.u32 %v994, 7
      %v996 = vsub.s32 2, %v995
      %v997 = vrot.slane %v887, %v996
      %v998 = vmul.f32 %v855, %v997
      %v999 = vmul.f32 %v856, %v997
      %v1000 = vmul.f32 %v857, %v997
      %v1001 = vmul.f32 %v858, %v997
      %v1002 = vmul.f32 %v859, %v997
      %v1003 = vmul.f32 %v860, %v997
      %v1004 = vmul.f32 %v861, %v997
      %v1005 = vmul.f32 %v862, %v997
      %v1006 = vmul.f32 %v863, %v997
      %v1007 = vmul.f32 %v864, %v997
      %v1008 = vmul.f32 %v865, %v997
      %v1009 = vmul.f32 %v866, %v997
      %v1010 = vmul.f32 %v867, %v997
      %v1011 = vmul.f32 %v868, %v997
      %v1012 = vmul.f32 %v869, %v997
      %v1013 = vmul.f32 %v870, %v997
      %v1014 = vmul.f32 %v871, %v997
      %v1015 = vmul.f32 %v872, %v997
      %v1016 = vmul.f32 %v873, %v997
      %v1017 = vmul.f32 %v874, %v997
      %v1018 = vmul.f32 %v875, %v997
      %v1019 = vmul.f32 %v876, %v997
      %v1020 = vmul.f32 %v877, %v997
      %v1021 = vmul.f32 %v878, %v997
      %v1022 = vmul.f32 %v879, %v997
      %v1023 = vmul.f32 %v880, %v997
      %v1024 = vmul.f32 %v881, %v997
      %v1025 = vmul.f32 %v882, %v997
      %v1026 = vmul.f32 %v883, %v997
      %v1027 = vmul.f32 %v884, %v997
      %v1028 = vadd.f32 %v964, %v998
      %v1029 = vadd.f32 %v965, %v999
      %v1030 = vadd.f32 %v966, %v1000
      %v1031 = vadd.f32 %v967, %v1001
      %v1032 = vadd.f32 %v968, %v1002
      %v1033 = vadd.f32 %v969, %v1003
      %v1034 = vadd.f32 %v970, %v1004
      %v1035 = vadd.f32 %v971, %v1005
      %v1036 = vadd.f32 %v972, %v1006
      %v1037 = vadd.f32 %v973, %v1007
      %v1038 = vadd.f32 %v974, %v1008
      %v1039 = vadd.f32 %v975, %v1009
      %v1040 = vadd.f32 %v976, %v1010
      %v1041 = vadd.f32 %v977, %v1011
      %v1042 = vadd.f32 %v978, %v1012
      %v1043 = vadd.f32 %v979, %v1013
      %v1044 = vadd.f32 %v980, %v1014
      %v1045 = vadd.f32 %v981, %v1015
      %v1046 = vadd.f32 %v982, %v1016
      %v1047 = vadd.f32 %v983, %v1017
      %v1048 = vadd.f32 %v984, %v1018
      %v1049 = vadd.f32 %v985, %v1019
      %v1050 = vadd.f32 %v986, %v1020
      %v1051 = vadd.f32 %v987, %v1021
      %v1052 = vadd.f32 %v988, %v1022
      %v1053 = vadd.f32 %v989, %v1023
      %v1054 = vadd.f32 %v990, %v1024
      %v1055 = vadd.f32 %v991, %v1025
      %v1056 = vadd.f32 %v992, %v1026
      %v1057 = vadd.f32 %v993, %v1027
      %v1058 = vadd.f32 %v894, 0.0
      %v1059 = vadd.f32 %v894, %v1028
      %v1060 = vadd.f32 %v894, %v1029
      %v1061 = vadd.f32 %v894, %v1030
      %v1062 = vadd.f32 %v894, %v1031
      %v1063 = vadd.f32 %v894, %v1032
      %v1064 = vadd.f32 %v894, %v1033
      %v1065 = vadd.f32 %v894, %v1034
      %v1066 = vadd.f32 %v894, %v1035
      %v1067 = vadd.f32 %v894, %v1036
      %v1068 = vadd.f32 %v894, %v1037
      %v1069 = vadd.f32 %v894, %v1038
      %v1070 = vadd.f32 %v894, %v1039
      %v1071 = vadd.f32 %v894, %v1040
      %v1072 = vadd.f32 %v894, %v1041
      %v1073 = vadd.f32 %v894, %v1042
      %v1074 = vadd.f32 %v894, %v1043
      %v1075 = vadd.f32 %v894, %v1044
      %v1076 = vadd.f32 %v894, %v1045
      %v1077 = vadd.f32 %v894, %v1046
      %v1078 = vadd.f32 %v894, %v1047
      %v1079 = vadd.f32 %v894, %v1048
      %v1080 = vadd.f32 %v894, %v1049
      %v1081 = vadd.f32 %v894, %v1050
      %v1082 = vadd.f32 %v894, %v1051
      %v1083 = vadd.f32 %v894, %v1052
      %v1084 = vadd.f32 %v894, %v1053
      %v1085 = vadd.f32 %v894, %v1054
      %v1086 = vadd.f32 %v894, %v1055
      %v1087 = vadd.f32 %v894, %v1056
      %v1088 = vadd.f32 %v894, %v1057
      %v1089 = vlaneseq
      %v1090 = vshrl.u32 %v1089, 7
      %v1091 = vsub.s32 3, %v1090
      %v1092 = vrot.slane %v887, %v1091
      %v1093 = vmul.f32 %v752, %v1092
      %v1094 = vmul.f32 %v753, %v1092
      %v1095 = vmul.f32 %v754, %v1092
      %v1096 = vmul.f32 %v755, %v1092
      %v1097 = vmul.f32 %v756, %v1092
      %v1098 = vmul.f32 %v757, %v1092
      %v1099 = vmul.f32 %v758, %v1092
      %v1100 = vmul.f32 %v759, %v1092
      %v1101 = vmul.f32 %v760, %v1092
      %v1102 = vmul.f32 %v761, %v1092
      %v1103 = vmul.f32 %v762, %v1092
      %v1104 = vmul.f32 %v763, %v1092
      %v1105 = vmul.f32 %v764, %v1092
      %v1106 = vmul.f32 %v765, %v1092
      %v1107 = vmul.f32 %v766, %v1092
      %v1108 = vmul.f32 %v767, %v1092
      %v1109 = vmul.f32 %v768, %v1092
      %v1110 = vmul.f32 %v769, %v1092
      %v1111 = vmul.f32 %v770, %v1092
      %v1112 = vmul.f32 %v771, %v1092
      %v1113 = vmul.f32 %v772, %v1092
      %v1114 = vmul.f32 %v773, %v1092
      %v1115 = vmul.f32 %v774, %v1092
      %v1116 = vmul.f32 %v775, %v1092
      %v1117 = vmul.f32 %v776, %v1092
      %v1118 = vmul.f32 %v777, %v1092
      %v1119 = vmul.f32 %v778, %v1092
      %v1120 = vmul.f32 %v779, %v1092
      %v1121 = vmul.f32 %v780, %v1092
      %v1122 = vmul.f32 %v781, %v1092
      %v1123 = vmul.f32 %v782, %v1092
      %v1124 = vmul.f32 %v783, %v1092
      %v1125 = vlaneseq
      %v1126 = vshrl.u32 %v1125, 7
      %v1127 = vsub.s32 4, %v1126
      %v1128 = vrot.slane %v887, %v1127
      %v1129 = vmul.f32 %v646, %v1128
      %v1130 = vmul.f32 %v647, %v1128
      %v1131 = vmul.f32 %v648, %v1128
      %v1132 = vmul.f32 %v649, %v1128
      %v1133 = vmul.f32 %v650, %v1128
      %v1134 = vmul.f32 %v651, %v1128
      %v1135 = vmul.f32 %v652, %v1128
      %v1136 = vmul.f32 %v653, %v1128
      %v1137 = vmul.f32 %v654, %v1128
      %v1138 = vmul.f32 %v655, %v1128
      %v1139 = vmul.f32 %v656, %v1128
      %v1140 = vmul.f32 %v657, %v1128
      %v1141 = vmul.f32 %v658, %v1128
      %v1142 = vmul.f32 %v659, %v1128
      %v1143 = vmul.f32 %v660, %v1128
      %v1144 = vmul.f32 %v661, %v1128
      %v1145 = vmul.f32 %v662, %v1128
      %v1146 = vmul.f32 %v663, %v1128
      %v1147 = vmul.f32 %v664, %v1128
      %v1148 = vmul.f32 %v665, %v1128
      %v1149 = vmul.f32 %v666, %v1128
      %v1150 = vmul.f32 %v667, %v1128
      %v1151 = vmul.f32 %v668, %v1128
      %v1152 = vmul.f32 %v669, %v1128
      %v1153 = vmul.f32 %v670, %v1128
      %v1154 = vmul.f32 %v671, %v1128
      %v1155 = vmul.f32 %v672, %v1128
      %v1156 = vmul.f32 %v673, %v1128
      %v1157 = vmul.f32 %v674, %v1128
      %v1158 = vmul.f32 %v675, %v1128
      %v1159 = vmul.f32 %v676, %v1128
      %v1160 = vmul.f32 %v677, %v1128
      %v1161 = vadd.f32 %v1093, %v1129
      %v1162 = vadd.f32 %v1094, %v1130
      %v1163 = vadd.f32 %v1095, %v1131
      %v1164 = vadd.f32 %v1096, %v1132
      %v1165 = vadd.f32 %v1097, %v1133
      %v1166 = vadd.f32 %v1098, %v1134
      %v1167 = vadd.f32 %v1099, %v1135
      %v1168 = vadd.f32 %v1100, %v1136
      %v1169 = vadd.f32 %v1101, %v1137
      %v1170 = vadd.f32 %v1102, %v1138
      %v1171 = vadd.f32 %v1103, %v1139
      %v1172 = vadd.f32 %v1104, %v1140
      %v1173 = vadd.f32 %v1105, %v1141
      %v1174 = vadd.f32 %v1106, %v1142
      %v1175 = vadd.f32 %v1107, %v1143
      %v1176 = vadd.f32 %v1108, %v1144
      %v1177 = vadd.f32 %v1109, %v1145
      %v1178 = vadd.f32 %v1110, %v1146
      %v1179 = vadd.f32 %v1111, %v1147
      %v1180 = vadd.f32 %v1112, %v1148
      %v1181 = vadd.f32 %v1113, %v1149
      %v1182 = vadd.f32 %v1114, %v1150
      %v1183 = vadd.f32 %v1115, %v1151
      %v1184 = vadd.f32 %v1116, %v1152
      %v1185 = vadd.f32 %v1117, %v1153
      %v1186 = vadd.f32 %v1118, %v1154
      %v1187 = vadd.f32 %v1119, %v1155
      %v1188 = vadd.f32 %v1120, %v1156
      %v1189 = vadd.f32 %v1121, %v1157
      %v1190 = vadd.f32 %v1122, %v1158
      %v1191 = vadd.f32 %v1123, %v1159
      %v1192 = vadd.f32 %v1124, %v1160
      %v1193 = vlaneseq
      %v1194 = vshrl.u32 %v1193, 7
      %v1195 = vsub.s32 5, %v1194
      %v1196 = vrot.slane %v887, %v1195
      %v1197 = vmul.f32 %v855, %v1196
      %v1198 = vmul.f32 %v856, %v1196
      %v1199 = vmul.f32 %v857, %v1196
      %v1200 = vmul.f32 %v858, %v1196
      %v1201 = vmul.f32 %v859, %v1196
      %v1202 = vmul.f32 %v860, %v1196
      %v1203 = vmul.f32 %v861, %v1196
      %v1204 = vmul.f32 %v862, %v1196
      %v1205 = vmul.f32 %v863, %v1196
      %v1206 = vmul.f32 %v864, %v1196
      %v1207 = vmul.f32 %v865, %v1196
      %v1208 = vmul.f32 %v866, %v1196
      %v1209 = vmul.f32 %v867, %v1196
      %v1210 = vmul.f32 %v868, %v1196
      %v1211 = vmul.f32 %v869, %v1196
      %v1212 = vmul.f32 %v870, %v1196
      %v1213 = vmul.f32 %v871, %v1196
      %v1214 = vmul.f32 %v872, %v1196
      %v1215 = vmul.f32 %v873, %v1196
      %v1216 = vmul.f32 %v874, %v1196
      %v1217 = vmul.f32 %v875, %v1196
      %v1218 = vmul.f32 %v876, %v1196
      %v1219 = vmul.f32 %v877, %v1196
      %v1220 = vmul.f32 %v878, %v1196
      %v1221 = vmul.f32 %v879, %v1196
      %v1222 = vmul.f32 %v880, %v1196
      %v1223 = vmul.f32 %v881, %v1196
      %v1224 = vmul.f32 %v882, %v1196
      %v1225 = vmul.f32 %v883, %v1196
      %v1226 = vmul.f32 %v884, %v1196
      %v1227 = vmul.f32 %v885, %v1196
      %v1228 = vmul.f32 %v886, %v1196
      %v1229 = vadd.f32 %v1161, %v1197
      %v1230 = vadd.f32 %v1162, %v1198
      %v1231 = vadd.f32 %v1163, %v1199
      %v1232 = vadd.f32 %v1164, %v1200
      %v1233 = vadd.f32 %v1165, %v1201
      %v1234 = vadd.f32 %v1166, %v1202
      %v1235 = vadd.f32 %v1167, %v1203
      %v1236 = vadd.f32 %v1168, %v1204
      %v1237 = vadd.f32 %v1169, %v1205
      %v1238 = vadd.f32 %v1170, %v1206
      %v1239 = vadd.f32 %v1171, %v1207
      %v1240 = vadd.f32 %v1172, %v1208
      %v1241 = vadd.f32 %v1173, %v1209
      %v1242 = vadd.f32 %v1174, %v1210
      %v1243 = vadd.f32 %v1175, %v1211
      %v1244 = vadd.f32 %v1176, %v1212
      %v1245 = vadd.f32 %v1177, %v1213
      %v1246 = vadd.f32 %v1178, %v1214
      %v1247 = vadd.f32 %v1179, %v1215
      %v1248 = vadd.f32 %v1180, %v1216
      %v1249 = vadd.f32 %v1181, %v1217
      %v1250 = vadd.f32 %v1182, %v1218
      %v1251 = vadd.f32 %v1183, %v1219
      %v1252 = vadd.f32 %v1184, %v1220
      %v1253 = vadd.f32 %v1185, %v1221
      %v1254 = vadd.f32 %v1186, %v1222
      %v1255 = vadd.f32 %v1187, %v1223
      %v1256 = vadd.f32 %v1188, %v1224
      %v1257 = vadd.f32 %v1189, %v1225
      %v1258 = vadd.f32 %v1190, %v1226
      %v1259 = vadd.f32 %v1191, %v1227
      %v1260 = vadd.f32 %v1192, %v1228
      %v1261 = vadd.f32 %v1058, %v1229
      %v1262 = vadd.f32 %v1058, %v1230
      %v1263 = vadd.f32 %v1059, %v1231
      %v1264 = vadd.f32 %v1060, %v1232
      %v1265 = vadd.f32 %v1061, %v1233
      %v1266 = vadd.f32 %v1062, %v1234
      %v1267 = vadd.f32 %v1063, %v1235
      %v1268 = vadd.f32 %v1064, %v1236
      %v1269 = vadd.f32 %v1065, %v1237
      %v1270 = vadd.f32 %v1066, %v1238
      %v1271 = vadd.f32 %v1067, %v1239
      %v1272 = vadd.f32 %v1068, %v1240
      %v1273 = vadd.f32 %v1069, %v1241
      %v1274 = vadd.f32 %v1070, %v1242
      %v1275 = vadd.f32 %v1071, %v1243
      %v1276 = vadd.f32 %v1072, %v1244
      %v1277 = vadd.f32 %v1073, %v1245
      %v1278 = vadd.f32 %v1074, %v1246
      %v1279 = vadd.f32 %v1075, %v1247
      %v1280 = vadd.f32 %v1076, %v1248
      %v1281 = vadd.f32 %v1077, %v1249
      %v1282 = vadd.f32 %v1078, %v1250
      %v1283 = vadd.f32 %v1079, %v1251
      %v1284 = vadd.f32 %v1080, %v1252
      %v1285 = vadd.f32 %v1081, %v1253
      %v1286 = vadd.f32 %v1082, %v1254
      %v1287 = vadd.f32 %v1083, %v1255
      %v1288 = vadd.f32 %v1084, %v1256
      %v1289 = vadd.f32 %v1085, %v1257
      %v1290 = vadd.f32 %v1086, %v1258
      %v1291 = vadd.f32 %v1087, %v1259
      %v1292 = vadd.f32 %v1088, %v1260
      %v1293 = vlaneseq
      %v1294 = vshrl.u32 %v1293, 7
      %v1295 = vsub.s32 6, %v1294
      %v1296 = vrot.slane %v887, %v1295
      %v1297 = vmul.f32 %v754, %v1296
      %v1298 = vmul.f32 %v755, %v1296
      %v1299 = vmul.f32 %v756, %v1296
      %v1300 = vmul.f32 %v757, %v1296
      %v1301 = vmul.f32 %v758, %v1296
      %v1302 = vmul.f32 %v759, %v1296
      %v1303 = vmul.f32 %v760, %v1296
      %v1304 = vmul.f32 %v761, %v1296
      %v1305 = vmul.f32 %v762, %v1296
      %v1306 = vmul.f32 %v763, %v1296
      %v1307 = vmul.f32 %v764, %v1296
      %v1308 = vmul.f32 %v765, %v1296
      %v1309 = vmul.f32 %v766, %v1296
      %v1310 = vmul.f32 %v767, %v1296
      %v1311 = vmul.f32 %v768, %v1296
      %v1312 = vmul.f32 %v769, %v1296
      %v1313 = vmul.f32 %v770, %v1296
      %v1314 = vmul.f32 %v771, %v1296
      %v1315 = vmul.f32 %v772, %v1296
      %v1316 = vmul.f32 %v773, %v1296
      %v1317 = vmul.f32 %v774, %v1296
      %v1318 = vmul.f32 %v775, %v1296
      %v1319 = vmul.f32 %v776, %v1296
      %v1320 = vmul.f32 %v777, %v1296
      %v1321 = vmul.f32 %v778, %v1296
      %v1322 = vmul.f32 %v779, %v1296
      %v1323 = vmul.f32 %v780, %v1296
      %v1324 = vmul.f32 %v781, %v1296
      %v1325 = vmul.f32 %v782, %v1296
      %v1326 = vmul.f32 %v783, %v1296
      %v1327 = vlaneseq
      %v1328 = vshrl.u32 %v1327, 7
      %v1329 = vsub.s32 7, %v1328
      %v1330 = vrot.slane %v887, %v1329
      %v1331 = vmul.f32 %v648, %v1330
      %v1332 = vmul.f32 %v649, %v1330
      %v1333 = vmul.f32 %v650, %v1330
      %v1334 = vmul.f32 %v651, %v1330
      %v1335 = vmul.f32 %v652, %v1330
      %v1336 = vmul.f32 %v653, %v1330
      %v1337 = vmul.f32 %v654, %v1330
      %v1338 = vmul.f32 %v655, %v1330
      %v1339 = vmul.f32 %v656, %v1330
      %v1340 = vmul.f32 %v657, %v1330
      %v1341 = vmul.f32 %v658, %v1330
      %v1342 = vmul.f32 %v659, %v1330
      %v1343 = vmul.f32 %v660, %v1330
      %v1344 = vmul.f32 %v661, %v1330
      %v1345 = vmul.f32 %v662, %v1330
      %v1346 = vmul.f32 %v663, %v1330
      %v1347 = vmul.f32 %v664, %v1330
      %v1348 = vmul.f32 %v665, %v1330
      %v1349 = vmul.f32 %v666, %v1330
      %v1350 = vmul.f32 %v667, %v1330
      %v1351 = vmul.f32 %v668, %v1330
      %v1352 = vmul.f32 %v669, %v1330
      %v1353 = vmul.f32 %v670, %v1330
      %v1354 = vmul.f32 %v671, %v1330
      %v1355 = vmul.f32 %v672, %v1330
      %v1356 = vmul.f32 %v673, %v1330
      %v1357 = vmul.f32 %v674, %v1330
      %v1358 = vmul.f32 %v675, %v1330
      %v1359 = vmul.f32 %v676, %v1330
      %v1360 = vmul.f32 %v677, %v1330
      %v1361 = vadd.f32 %v1297, %v1331
      %v1362 = vadd.f32 %v1298, %v1332
      %v1363 = vadd.f32 %v1299, %v1333
      %v1364 = vadd.f32 %v1300, %v1334
      %v1365 = vadd.f32 %v1301, %v1335
      %v1366 = vadd.f32 %v1302, %v1336
      %v1367 = vadd.f32 %v1303, %v1337
      %v1368 = vadd.f32 %v1304, %v1338
      %v1369 = vadd.f32 %v1305, %v1339
      %v1370 = vadd.f32 %v1306, %v1340
      %v1371 = vadd.f32 %v1307, %v1341
      %v1372 = vadd.f32 %v1308, %v1342
      %v1373 = vadd.f32 %v1309, %v1343
      %v1374 = vadd.f32 %v1310, %v1344
      %v1375 = vadd.f32 %v1311, %v1345
      %v1376 = vadd.f32 %v1312, %v1346
      %v1377 = vadd.f32 %v1313, %v1347
      %v1378 = vadd.f32 %v1314, %v1348
      %v1379 = vadd.f32 %v1315, %v1349
      %v1380 = vadd.f32 %v1316, %v1350
      %v1381 = vadd.f32 %v1317, %v1351
      %v1382 = vadd.f32 %v1318, %v1352
      %v1383 = vadd.f32 %v1319, %v1353
      %v1384 = vadd.f32 %v1320, %v1354
      %v1385 = vadd.f32 %v1321, %v1355
      %v1386 = vadd.f32 %v1322, %v1356
      %v1387 = vadd.f32 %v1323, %v1357
      %v1388 = vadd.f32 %v1324, %v1358
      %v1389 = vadd.f32 %v1325, %v1359
      %v1390 = vadd.f32 %v1326, %v1360
      %v1391 = vlaneseq
      %v1392 = vshrl.u32 %v1391, 7
      %v1393 = vsub.s32 0, %v1392
      %v1394 = vrot.slane %v888, %v1393
      %v1395 = vmul.f32 %v857, %v1394
      %v1396 = vmul.f32 %v858, %v1394
      %v1397 = vmul.f32 %v859, %v1394
      %v1398 = vmul.f32 %v860, %v1394
      %v1399 = vmul.f32 %v861, %v1394
      %v1400 = vmul.f32 %v862, %v1394
      %v1401 = vmul.f32 %v863, %v1394
      %v1402 = vmul.f32 %v864, %v1394
      %v1403 = vmul.f32 %v865, %v1394
      %v1404 = vmul.f32 %v866, %v1394
      %v1405 = vmul.f32 %v867, %v1394
      %v1406 = vmul.f32 %v868, %v1394
      %v1407 = vmul.f32 %v869, %v1394
      %v1408 = vmul.f32 %v870, %v1394
      %v1409 = vmul.f32 %v871, %v1394
      %v1410 = vmul.f32 %v872, %v1394
      %v1411 = vmul.f32 %v873, %v1394
      %v1412 = vmul.f32 %v874, %v1394
      %v1413 = vmul.f32 %v875, %v1394
      %v1414 = vmul.f32 %v876, %v1394
      %v1415 = vmul.f32 %v877, %v1394
      %v1416 = vmul.f32 %v878, %v1394
      %v1417 = vmul.f32 %v879, %v1394
      %v1418 = vmul.f32 %v880, %v1394
      %v1419 = vmul.f32 %v881, %v1394
      %v1420 = vmul.f32 %v882, %v1394
      %v1421 = vmul.f32 %v883, %v1394
      %v1422 = vmul.f32 %v884, %v1394
      %v1423 = vmul.f32 %v885, %v1394
      %v1424 = vmul.f32 %v886, %v1394
      %v1425 = vadd.f32 %v1361, %v1395
      %v1426 = vadd.f32 %v1362, %v1396
      %v1427 = vadd.f32 %v1363, %v1397
      %v1428 = vadd.f32 %v1364, %v1398
      %v1429 = vadd.f32 %v1365, %v1399
      %v1430 = vadd.f32 %v1366, %v1400
      %v1431 = vadd.f32 %v1367, %v1401
      %v1432 = vadd.f32 %v1368, %v1402
      %v1433 = vadd.f32 %v1369, %v1403
      %v1434 = vadd.f32 %v1370, %v1404
      %v1435 = vadd.f32 %v1371, %v1405
      %v1436 = vadd.f32 %v1372, %v1406
      %v1437 = vadd.f32 %v1373, %v1407
      %v1438 = vadd.f32 %v1374, %v1408
      %v1439 = vadd.f32 %v1375, %v1409
      %v1440 = vadd.f32 %v1376, %v1410
      %v1441 = vadd.f32 %v1377, %v1411
      %v1442 = vadd.f32 %v1378, %v1412
      %v1443 = vadd.f32 %v1379, %v1413
      %v1444 = vadd.f32 %v1380, %v1414
      %v1445 = vadd.f32 %v1381, %v1415
      %v1446 = vadd.f32 %v1382, %v1416
      %v1447 = vadd.f32 %v1383, %v1417
      %v1448 = vadd.f32 %v1384, %v1418
      %v1449 = vadd.f32 %v1385, %v1419
      %v1450 = vadd.f32 %v1386, %v1420
      %v1451 = vadd.f32 %v1387, %v1421
      %v1452 = vadd.f32 %v1388, %v1422
      %v1453 = vadd.f32 %v1389, %v1423
      %v1454 = vadd.f32 %v1390, %v1424
      %v1455 = vadd.f32 %v1261, %v1425
      %v1456 = vadd.f32 %v1262, %v1426
      %v1457 = vadd.f32 %v1263, %v1427
      %v1458 = vadd.f32 %v1264, %v1428
      %v1459 = vadd.f32 %v1265, %v1429
      %v1460 = vadd.f32 %v1266, %v1430
      %v1461 = vadd.f32 %v1267, %v1431
      %v1462 = vadd.f32 %v1268, %v1432
      %v1463 = vadd.f32 %v1269, %v1433
      %v1464 = vadd.f32 %v1270, %v1434
      %v1465 = vadd.f32 %v1271, %v1435
      %v1466 = vadd.f32 %v1272, %v1436
      %v1467 = vadd.f32 %v1273, %v1437
      %v1468 = vadd.f32 %v1274, %v1438
      %v1469 = vadd.f32 %v1275, %v1439
      %v1470 = vadd.f32 %v1276, %v1440
      %v1471 = vadd.f32 %v1277, %v1441
      %v1472 = vadd.f32 %v1278, %v1442
      %v1473 = vadd.f32 %v1279, %v1443
      %v1474 = vadd.f32 %v1280, %v1444
      %v1475 = vadd.f32 %v1281, %v1445
      %v1476 = vadd.f32 %v1282, %v1446
      %v1477 = vadd.f32 %v1283, %v1447
      %v1478 = vadd.f32 %v1284, %v1448
      %v1479 = vadd.f32 %v1285, %v1449
      %v1480 = vadd.f32 %v1286, %v1450
      %v1481 = vadd.f32 %v1287, %v1451
      %v1482 = vadd.f32 %v1288, %v1452
      %v1483 = vadd.f32 %v1289, %v1453
      %v1484 = vadd.f32 %v1290, %v1454
      %v1485 = vadd.f32 %v1291, 0.0
      %v1486 = vadd.f32 %v1292, 0.0
      %v1487 = vmax.f32 %v1455, 0.0
      %v1488 = vmax.f32 %v1456, 0.0
      %v1489 = vmax.f32 %v1457, 0.0
      %v1490 = vmax.f32 %v1458, 0.0
      %v1491 = vmax.f32 %v1459, 0.0
      %v1492 = vmax.f32 %v1460, 0.0
      %v1493 = vmax.f32 %v1461, 0.0
      %v1494 = vmax.f32 %v1462, 0.0
      %v1495 = vmax.f32 %v1463, 0.0
      %v1496 = vmax.f32 %v1464, 0.0
      %v1497 = vmax.f32 %v1465, 0.0
      %v1498 = vmax.f32 %v1466, 0.0
      %v1499 = vmax.f32 %v1467, 0.0
      %v1500 = vmax.f32 %v1468, 0.0
      %v1501 = vmax.f32 %v1469, 0.0
      %v1502 = vmax.f32 %v1470, 0.0
      %v1503 = vmax.f32 %v1471, 0.0
      %v1504 = vmax.f32 %v1472, 0.0
      %v1505 = vmax.f32 %v1473, 0.0
      %v1506 = vmax.f32 %v1474, 0.0
      %v1507 = vmax.f32 %v1475, 0.0
      %v1508 = vmax.f32 %v1476, 0.0
      %v1509 = vmax.f32 %v1477, 0.0
      %v1510 = vmax.f32 %v1478, 0.0
      %v1511 = vmax.f32 %v1479, 0.0
      %v1512 = vmax.f32 %v1480, 0.0
      %v1513 = vmax.f32 %v1481, 0.0
      %v1514 = vmax.f32 %v1482, 0.0
      %v1515 = vmax.f32 %v1483, 0.0
      %v1516 = vmax.f32 %v1484, 0.0
      %v1517 = vmax.f32 %v1485, 0.0
      %v1518 = vmax.f32 %v1486, 0.0
      %v1519 = vmin.f32 %v1487, 6.0
      %v1520 = vmin.f32 %v1488, 6.0
      %v1521 = vmin.f32 %v1489, 6.0
      %v1522 = vmin.f32 %v1490, 6.0
      %v1523 = vmin.f32 %v1491, 6.0
      %v1524 = vmin.f32 %v1492, 6.0
      %v1525 = vmin.f32 %v1493, 6.0
      %v1526 = vmin.f32 %v1494, 6.0
      %v1527 = vmin.f32 %v1495, 6.0
      %v1528 = vmin.f32 %v1496, 6.0
      %v1529 = vmin.f32 %v1497, 6.0
      %v1530 = vmin.f32 %v1498, 6.0
      %v1531 = vmin.f32 %v1499, 6.0
      %v1532 = vmin.f32 %v1500, 6.0
      %v1533 = vmin.f32 %v1501, 6.0
      %v1534 = vmin.f32 %v1502, 6.0
      %v1535 = vmin.f32 %v1503, 6.0
      %v1536 = vmin.f32 %v1504, 6.0
      %v1537 = vmin.f32 %v1505, 6.0
      %v1538 = vmin.f32 %v1506, 6.0
      %v1539 = vmin.f32 %v1507, 6.0
      %v1540 = vmin.f32 %v1508, 6.0
      %v1541 = vmin.f32 %v1509, 6.0
      %v1542 = vmin.f32 %v1510, 6.0
      %v1543 = vmin.f32 %v1511, 6.0
      %v1544 = vmin.f32 %v1512, 6.0
      %v1545 = vmin.f32 %v1513, 6.0
      %v1546 = vmin.f32 %v1514, 6.0
      %v1547 = vmin.f32 %v1515, 6.0
      %v1548 = vmin.f32 %v1516, 6.0
      %v1549 = vmin.f32 %v1517, 6.0
      %v1550 = vmin.f32 %v1518, 6.0
      %v1551 = vpack.c.bf16 %v1520, %v1519
      %v1552 = vpack.c.bf16 %v1522, %v1521
      %v1553 = vpack.c.bf16 %v1524, %v1523
      %v1554 = vpack.c.bf16 %v1526, %v1525
      %v1555 = vpack.c.bf16 %v1528, %v1527
      %v1556 = vpack.c.bf16 %v1530, %v1529
      %v1557 = vpack.c.bf16 %v1532, %v1531
      %v1558 = vpack.c.bf16 %v1534, %v1533
      %v1559 = vpack.c.bf16 %v1536, %v1535
      %v1560 = vpack.c.bf16 %v1538, %v1537
      %v1561 = vpack.c.bf16 %v1540, %v1539
      %v1562 = vpack.c.bf16 %v1542, %v1541
      %v1563 = vpack.c.bf16 %v1544, %v1543
      %v1564 = vpack.c.bf16 %v1546, %v1545
      %v1565 = vpack.c.bf16 %v1548, %v1547
      %v1566 = vpack.c.bf16 %v1550, %v1549
      %v1567 = vld [vmem:[%s5] sm:$0xf]
      %v1568 = vld [vmem:[%s5 + $0x4] sm:$0xf]
      %v1569 = vld [vmem:[%s5 + $0x8] sm:$0xf]
      %v1570 = vld [vmem:[%s5 + $0xc] sm:$0xf]
      %v1571 = vld [vmem:[%s5 + $0x10] sm:$0xf]
      %v1572 = vld [vmem:[%s5 + $0x14] sm:$0xf]
      %v1573 = vld [vmem:[%s5 + $0x18] sm:$0xf]
      %v1574 = vld [vmem:[%s5 + $0x1c] sm:$0xf]
      %v1575 = vld [vmem:[%s5 + $0x20] sm:$0xf]
      %v1576 = vld [vmem:[%s5 + $0x24] sm:$0xf]
      %v1577 = vld [vmem:[%s5 + $0x28] sm:$0xf]
      %v1578 = vld [vmem:[%s5 + $0x2c] sm:$0xf]
      %v1579 = vld [vmem:[%s5 + $0x30] sm:$0xf]
      %v1580 = vld [vmem:[%s5 + $0x34] sm:$0xf]
      %v1581 = vld [vmem:[%s5 + $0x38] sm:$0xf]
      %v1582 = vld [vmem:[%s5 + $0x3c] sm:$0xf]
      %v1583 = vld [vmem:[%s6] sm:$0x1]
      %v1585 = vlaneseq
      %v1586 = vshrl.u32 %v1585, 7
      %v1587 = vsub.s32 0, %v1586
      %v1588 = vrot.slane %v1583, %v1587
      %v1606 = vunpack.c.l.b16 %v1567
      %v1607 = vunpack.c.l.b16 %v1568
      %v1608 = vunpack.c.l.b16 %v1569
      %v1609 = vunpack.c.l.b16 %v1570
      %v1610 = vunpack.c.l.b16 %v1571
      %v1611 = vunpack.c.l.b16 %v1572
      %v1612 = vunpack.c.l.b16 %v1573
      %v1613 = vunpack.c.l.b16 %v1574
      %v1614 = vunpack.c.l.b16 %v1575
      %v1615 = vunpack.c.l.b16 %v1576
      %v1616 = vunpack.c.l.b16 %v1577
      %v1617 = vunpack.c.l.b16 %v1578
      %v1618 = vunpack.c.l.b16 %v1579
      %v1619 = vunpack.c.l.b16 %v1580
      %v1620 = vunpack.c.l.b16 %v1581
      %v1621 = vunpack.c.l.b16 %v1582
      %v1622 = vpack.c.b16 %v1607, %v1606
      %v1623 = vpack.c.b16 %v1609, %v1608
      %v1624 = vpack.c.b16 %v1611, %v1610
      %v1625 = vpack.c.b16 %v1613, %v1612
      %v1626 = vpack.c.b16 %v1615, %v1614
      %v1627 = vpack.c.b16 %v1617, %v1616
      %v1628 = vpack.c.b16 %v1619, %v1618
      %v1629 = vpack.c.b16 %v1621, %v1620
      %1638 = vmatprep.subr.bf16.mxu0 0
      %1639 = vmatpush1.bf16.msra.mxu0 %v1629
      %1640 = vmatprep.subr.bf16.mxu0 0
      %1641 = vmatpush1.bf16.msra.mxu0 %v1628
      %1642 = vmatprep.subr.bf16.mxu0 0
      %1643 = vmatpush1.bf16.msra.mxu0 %v1627
      %1644 = vmatprep.subr.bf16.mxu0 0
      %1645 = vmatpush1.bf16.msra.mxu0 %v1626
      %1646 = vmatprep.subr.bf16.mxu0 0
      %1647 = vmatpush1.bf16.msra.mxu0 %v1625
      %1648 = vmatprep.subr.bf16.mxu0 0
      %1649 = vmatpush1.bf16.msra.mxu0 %v1624
      %1650 = vmatprep.subr.bf16.mxu0 0
      %1651 = vmatpush1.bf16.msra.mxu0 %v1623
      %1652 = vmatprep.subr.bf16.mxu0 0
      %1653 = vmatpush1.bf16.msra.mxu0 %v1622
      %1654 = vmatprep.subr.bf16.mxu0 0
      %1655 = vmatpush2.bf16.msra.mxu0 0
      %1656 = vmatprep.subr.bf16.mxu0 0
      %1657 = vmatpush2.bf16.msra.mxu0 0
      %1658 = vmatprep.subr.bf16.mxu0 0
      %1659 = vmatpush2.bf16.msra.mxu0 0
      %1660 = vmatprep.subr.bf16.mxu0 0
      %1661 = vmatpush2.bf16.msra.mxu0 0
      %1662 = vmatprep.subr.bf16.mxu0 0
      %1663 = vmatpush2.bf16.msra.mxu0 0
      %1664 = vmatprep.subr.bf16.mxu0 0
      %1665 = vmatpush2.bf16.msra.mxu0 0
      %1666 = vmatprep.subr.bf16.mxu0 0
      %1667 = vmatpush2.bf16.msra.mxu0 0
      %1668 = vmatprep.subr.bf16.mxu0 0
      %1669 = vmatpush2.bf16.msra.mxu0 0
      %1670 = vmatprep.mubr.bf16.mxu0 0
      %1671 = vmatmul.mubr.bf16.gmra.mxu0 %v1551
      %v1672 = vpop.f32.mrf.mxu0
      %v1673 = vadd.f32 %v1588, %v1672
      %v1674 = vpop.f32.mrf.mxu0
      %v1675 = vpop.f32.mrf.mxu0
      %v1676 = vadd.f32 %v1588, %v1675
      %v1677 = vpop.f32.mrf.mxu0
      %1678 = vmatprep.mubr.bf16.mxu0 0
      %1679 = vmatmul.mubr.bf16.gmra.mxu0 %v1552
      %v1680 = vpop.f32.mrf.mxu0
      %v1681 = vadd.f32 %v1588, %v1680
      %v1682 = vpop.f32.mrf.mxu0
      %v1683 = vpop.f32.mrf.mxu0
      %v1684 = vadd.f32 %v1588, %v1683
      %v1685 = vpop.f32.mrf.mxu0
      %1686 = vmatprep.mubr.bf16.mxu0 0
      %1687 = vmatmul.mubr.bf16.gmra.mxu0 %v1553
      %v1688 = vpop.f32.mrf.mxu0
      %v1689 = vadd.f32 %v1588, %v1688
      %v1690 = vpop.f32.mrf.mxu0
      %v1691 = vpop.f32.mrf.mxu0
      %v1692 = vadd.f32 %v1588, %v1691
      %v1693 = vpop.f32.mrf.mxu0
      %1694 = vmatprep.mubr.bf16.mxu0 0
      %1695 = vmatmul.mubr.bf16.gmra.mxu0 %v1554
      %v1696 = vpop.f32.mrf.mxu0
      %v1697 = vadd.f32 %v1588, %v1696
      %v1698 = vpop.f32.mrf.mxu0
      %v1699 = vpop.f32.mrf.mxu0
      %v1700 = vadd.f32 %v1588, %v1699
      %v1701 = vpop.f32.mrf.mxu0
      %1702 = vmatprep.mubr.bf16.mxu0 0
      %1703 = vmatmul.mubr.bf16.gmra.mxu0 %v1555
      %v1704 = vpop.f32.mrf.mxu0
      %v1705 = vadd.f32 %v1588, %v1704
      %v1706 = vpop.f32.mrf.mxu0
      %v1707 = vpop.f32.mrf.mxu0
      %v1708 = vadd.f32 %v1588, %v1707
      %v1709 = vpop.f32.mrf.mxu0
      %1710 = vmatprep.mubr.bf16.mxu0 0
      %1711 = vmatmul.mubr.bf16.gmra.mxu0 %v1556
      %v1712 = vpop.f32.mrf.mxu0
      %v1713 = vadd.f32 %v1588, %v1712
      %v1714 = vpop.f32.mrf.mxu0
      %v1715 = vpop.f32.mrf.mxu0
      %v1716 = vadd.f32 %v1588, %v1715
      %v1717 = vpop.f32.mrf.mxu0
      %1718 = vmatprep.mubr.bf16.mxu0 0
      %1719 = vmatmul.mubr.bf16.gmra.mxu0 %v1557
      %v1720 = vpop.f32.mrf.mxu0
      %v1721 = vadd.f32 %v1588, %v1720
      %v1722 = vpop.f32.mrf.mxu0
      %v1723 = vpop.f32.mrf.mxu0
      %v1724 = vadd.f32 %v1588, %v1723
      %v1725 = vpop.f32.mrf.mxu0
      %1726 = vmatprep.mubr.bf16.mxu0 0
      %1727 = vmatmul.mubr.bf16.gmra.mxu0 %v1558
      %v1728 = vpop.f32.mrf.mxu0
      %v1729 = vadd.f32 %v1588, %v1728
      %v1730 = vpop.f32.mrf.mxu0
      %v1731 = vpop.f32.mrf.mxu0
      %v1732 = vadd.f32 %v1588, %v1731
      %v1733 = vpop.f32.mrf.mxu0
      %1734 = vmatprep.mubr.bf16.mxu0 0
      %1735 = vmatmul.mubr.bf16.gmra.mxu0 %v1559
      %v1736 = vpop.f32.mrf.mxu0
      %v1737 = vadd.f32 %v1588, %v1736
      %v1738 = vpop.f32.mrf.mxu0
      %v1739 = vpop.f32.mrf.mxu0
      %v1740 = vadd.f32 %v1588, %v1739
      %v1741 = vpop.f32.mrf.mxu0
      %1742 = vmatprep.mubr.bf16.mxu0 0
      %1743 = vmatmul.mubr.bf16.gmra.mxu0 %v1560
      %v1744 = vpop.f32.mrf.mxu0
      %v1745 = vadd.f32 %v1588, %v1744
      %v1746 = vpop.f32.mrf.mxu0
      %v1747 = vpop.f32.mrf.mxu0
      %v1748 = vadd.f32 %v1588, %v1747
      %v1749 = vpop.f32.mrf.mxu0
      %1750 = vmatprep.mubr.bf16.mxu0 0
      %1751 = vmatmul.mubr.bf16.gmra.mxu0 %v1561
      %v1752 = vpop.f32.mrf.mxu0
      %v1753 = vadd.f32 %v1588, %v1752
      %v1754 = vpop.f32.mrf.mxu0
      %v1755 = vpop.f32.mrf.mxu0
      %v1756 = vadd.f32 %v1588, %v1755
      %v1757 = vpop.f32.mrf.mxu0
      %1758 = vmatprep.mubr.bf16.mxu0 0
      %1759 = vmatmul.mubr.bf16.gmra.mxu0 %v1562
      %v1760 = vpop.f32.mrf.mxu0
      %v1761 = vadd.f32 %v1588, %v1760
      %v1762 = vpop.f32.mrf.mxu0
      %v1763 = vpop.f32.mrf.mxu0
      %v1764 = vadd.f32 %v1588, %v1763
      %v1765 = vpop.f32.mrf.mxu0
      %1766 = vmatprep.mubr.bf16.mxu0 0
      %1767 = vmatmul.mubr.bf16.gmra.mxu0 %v1563
      %v1768 = vpop.f32.mrf.mxu0
      %v1769 = vadd.f32 %v1588, %v1768
      %v1770 = vpop.f32.mrf.mxu0
      %v1771 = vpop.f32.mrf.mxu0
      %v1772 = vadd.f32 %v1588, %v1771
      %v1773 = vpop.f32.mrf.mxu0
      %1774 = vmatprep.mubr.bf16.mxu0 0
      %1775 = vmatmul.mubr.bf16.gmra.mxu0 %v1564
      %v1776 = vpop.f32.mrf.mxu0
      %v1777 = vadd.f32 %v1588, %v1776
      %v1778 = vpop.f32.mrf.mxu0
      %v1779 = vpop.f32.mrf.mxu0
      %v1780 = vadd.f32 %v1588, %v1779
      %v1781 = vpop.f32.mrf.mxu0
      %1782 = vmatprep.mubr.bf16.mxu0 0
      %1783 = vmatmul.mubr.bf16.gmra.mxu0 %v1565
      %v1784 = vpop.f32.mrf.mxu0
      %v1785 = vadd.f32 %v1588, %v1784
      %v1786 = vpop.f32.mrf.mxu0
      %v1787 = vpop.f32.mrf.mxu0
      %v1788 = vadd.f32 %v1588, %v1787
      %v1789 = vpop.f32.mrf.mxu0
      %1790 = vmatprep.mubr.bf16.mxu0 0
      %1791 = vmatmul.mubr.bf16.gmra.mxu0 %v1566
      %v1792 = vpop.f32.mrf.mxu0
      %v1793 = vadd.f32 %v1588, %v1792
      %v1794 = vpop.f32.mrf.mxu0
      %v1795 = vpop.f32.mrf.mxu0
      %v1796 = vadd.f32 %v1588, %v1795
      %v1797 = vpop.f32.mrf.mxu0
      %1798 = vdwg.mxu0
      %vm1799 = vcmask 64512
      %1800 = vst.msk [vmem:[%s278] sm:$0xff] %vm1799, %v1673
      %1801 = vst.msk [vmem:[%s278 + $0x8] sm:$0xff] %vm1799, %v1676
      %1802 = vst.msk [vmem:[%s278 + $0x10] sm:$0xff] %vm1799, %v1681
      %1803 = vst.msk [vmem:[%s278 + $0x18] sm:$0xff] %vm1799, %v1684
      %1804 = vst.msk [vmem:[%s278 + $0x20] sm:$0xff] %vm1799, %v1689
      %1805 = vst.msk [vmem:[%s278 + $0x28] sm:$0xff] %vm1799, %v1692
      %1806 = vst.msk [vmem:[%s278 + $0x30] sm:$0xff] %vm1799, %v1697
      %1807 = vst.msk [vmem:[%s278 + $0x38] sm:$0xff] %vm1799, %v1700
      %1808 = vst.msk [vmem:[%s278 + $0x40] sm:$0xff] %vm1799, %v1705
      %1809 = vst.msk [vmem:[%s278 + $0x48] sm:$0xff] %vm1799, %v1708
      %1810 = vst.msk [vmem:[%s278 + $0x50] sm:$0xff] %vm1799, %v1713
      %1811 = vst.msk [vmem:[%s278 + $0x58] sm:$0xff] %vm1799, %v1716
      %1812 = vst.msk [vmem:[%s278 + $0x60] sm:$0xff] %vm1799, %v1721
      %1813 = vst.msk [vmem:[%s278 + $0x68] sm:$0xff] %vm1799, %v1724
      %1814 = vst.msk [vmem:[%s278 + $0x70] sm:$0xff] %vm1799, %v1729
      %1815 = vst.msk [vmem:[%s278 + $0x78] sm:$0xff] %vm1799, %v1732
      %1816 = vst.msk [vmem:[%s278 + $0x80] sm:$0xff] %vm1799, %v1737
      %1817 = vst.msk [vmem:[%s278 + $0x88] sm:$0xff] %vm1799, %v1740
      %1818 = vst.msk [vmem:[%s278 + $0x90] sm:$0xff] %vm1799, %v1745
      %1819 = vst.msk [vmem:[%s278 + $0x98] sm:$0xff] %vm1799, %v1748
      %1820 = vst.msk [vmem:[%s278 + $0xa0] sm:$0xff] %vm1799, %v1753
      %1821 = vst.msk [vmem:[%s278 + $0xa8] sm:$0xff] %vm1799, %v1756
      %1822 = vst.msk [vmem:[%s278 + $0xb0] sm:$0xff] %vm1799, %v1761
      %1823 = vst.msk [vmem:[%s278 + $0xb8] sm:$0xff] %vm1799, %v1764
      %1824 = vst.msk [vmem:[%s278 + $0xc0] sm:$0xff] %vm1799, %v1769
      %1825 = vst.msk [vmem:[%s278 + $0xc8] sm:$0xff] %vm1799, %v1772
      %1826 = vst.msk [vmem:[%s278 + $0xd0] sm:$0xff] %vm1799, %v1777
      %1827 = vst.msk [vmem:[%s278 + $0xd8] sm:$0xff] %vm1799, %v1780
      %1828 = vst.msk [vmem:[%s278 + $0xe0] sm:$0xff] %vm1799, %v1785
      %1829 = vst.msk [vmem:[%s278 + $0xe8] sm:$0xff] %vm1799, %v1788
      %1830 = vst.msk [vmem:[%s278 + $0xf0] sm:$0xff] %vm1799, %v1793
      %1831 = vst.msk [vmem:[%s278 + $0xf8] sm:$0xff] %vm1799, %v1796
      %p1832 = scmp.lt.s32.totalorder %s18, 1
      %s1833 = scalar_select %p1832, %s18, 1
      %s1834 = smul.addr %s1833, 32
      %s1835 = smul.addr %s1834, 8
      %s1836 = scalar_lea.vmem %s7, %s1835
      // Predicated region
      $region49: #{tpu_custom_call.1} parent=47 // pred_check
        %p1837 = pneg %p188
      $region50: #{tpu_custom_call.1} parent=47 // pred_check_branch
        %1839 = sbr.rel (%p1837) target = $region52
      $region51: #{tpu_custom_call.1} parent=47 // pred_region
        _
      $region52: #{tpu_custom_call.1} parent=47 // pred_fallthru
        _
    $region48: #{tpu_custom_call.1} parent=5 // pred_fallthru
      _
    %p1840 = scmp.le.s32.totalorder 2, %s13
    // Predicated region
    $region53: #{tpu_custom_call.1} parent=5 // pred_check
      %p1841 = pneg %p1840
    $region54: #{tpu_custom_call.1} parent=5 // pred_check_branch
      %1843 = sbr.rel (%p1841) target = $region56
    $region55: #{tpu_custom_call.1} parent=5 // pred_region
      %s1844 = ssub.s32 %s13, 2
      // Predicated region
      $region57: #{tpu_custom_call.1} parent=55 // pred_check
        %p1845 = pneg %p194
      $region58: #{tpu_custom_call.1} parent=55 // pred_check_branch
        %1847 = sbr.rel (%p1845) target = $region60
      $region59: #{tpu_custom_call.1} parent=55 // pred_region
        %p1848 = scmp.lt.s32.totalorder %s19, 1
        %s1849 = scalar_select %p1848, %s19, 1
        %s1850 = smul.addr %s1849, 32
        %s1851 = smul.addr %s1850, 8
        %s1852 = scalar_lea.vmem %s7, %s1851
      $region60: #{tpu_custom_call.1} parent=55 // pred_fallthru
        _
    $region56: #{tpu_custom_call.1} parent=5 // pred_fallthru
      _
  $region6: #{tpu_custom_call.1} parent=0 // loop_footer
    %s17 = sadd.s32 1, %s13
  $region7: #{tpu_custom_call.1} parent=0 // loop_footer_branch
    %12 = sbr.rel target = $region3
  $region8: #{tpu_custom_call.1} parent=0 // loop_exit
    _

</llo_original>
